<compile_context>
chip_gen: v7x
topology: tpu7x:2x2x1
jax: 0.10.0
libtpu: 0.0.40
codegen_flags: <defaults>
</compile_context>

<pallas_src>
import functools

import jax
import jax.numpy as jnp
from jax import lax
from jax.experimental import pallas as pl
from jax.experimental.pallas import tpu as pltpu


def _round_up(x, m):
    return (x + m - 1) // m * m


_VMEM_BUDGET = 36 * 1024 * 1024   # conservative: fits v7x's 64 MiB physical VMEM with headroom


def _vmem_estimate(tq, tk, d_pad, itemsize):
    """Per-step VMEM: double-buffered feature blocks + f32 temporaries + accumulators."""
    return (2 * 2 * (tq + tk) * d_pad * itemsize   # row + col feature blocks (double-buffered)
            + 6 * tq * tk * 4                      # sim / exp / label & index mask temporaries
            + 3 * tq * 128 * 4)                    # lane-parallel accumulators


def _pick_tiles(n, d_pad, itemsize):
    """Pick (TQ, TK, n_pad).

    n_pad = round_up(N, 128): minimal padding (work scales with n_pad^2).
    TK/TQ: largest multiple-of-128 divisors of n_pad (<= 512) fitting the VMEM budget.
    If that leaves a single row tile, shrink TQ so the parallel axis has >= 2 programs
    (v7x has 2 TensorCores).
    """
    n_pad = _round_up(max(n, 1), 128)
    cands = [t for t in (128, 256, 384, 512) if n_pad % t == 0]
    fitting = [t for t in cands if _vmem_estimate(t, t, d_pad, itemsize) <= _VMEM_BUDGET]
    # TODO(synk): if even 128x128 tiles do not fit (huge D), the D axis would also need tiling.
    tk = max(fitting) if fitting else 128
    tq = tk
    if n_pad // tq < 2:
        for t in sorted(cands, reverse=True):
            if n_pad // t >= 2 and _vmem_estimate(t, tk, d_pad, itemsize) <= _VMEM_BUDGET:
                tq = t
                break
    return tq, tk, n_pad


def _sup_con_kernel(lhs_ref, rhsT_ref, lab_r_ref, lab_c_ref,
                    loss_ref, valid_ref,
                    acc_pos, acc_all, acc_cnt,
                    *, n_real, tq, tk, has_pad):
    i = pl.program_id(0)          # row tile (parallel)
    j = pl.program_id(1)          # col tile (reduction)
    n_j = pl.num_programs(1)

    @pl.when(j == 0)
    def _():
        acc_pos[...] = jnp.zeros_like(acc_pos)
        acc_all[...] = jnp.zeros_like(acc_all)
        acc_cnt[...] = jnp.zeros_like(acc_cnt)

    # (TQ, d_pad) @ (d_pad, TK): L2 norm and 1/T already folded into the operands by
    # the wrapper; RHS arrives pre-transposed so no in-kernel transpose is needed.
    sim = jnp.dot(lhs_ref[...], rhsT_ref[...], preferred_element_type=jnp.float32)
    e = jnp.exp(sim)                                   # single EUP pass per tile
    same = lab_r_ref[...] == lab_c_ref[...]            # (TQ,1)==(1,TK) -> (TQ,TK)

    n_slices = tk // 128
    r0 = i * tq
    c0 = j * tk

    # Only tiles touching the diagonal (or the padded last column tile) need index masks.
    diag = jnp.logical_and(r0 < c0 + tk, c0 < r0 + tq)
    boundary = jnp.logical_or(diag, j == n_j - 1) if has_pad else diag

    @pl.when(boundary)
    def _():
        row_idx = r0 + lax.broadcasted_iota(jnp.int32, (tq, tk), 0)
        col_idx = c0 + lax.broadcasted_iota(jnp.int32, (tq, tk), 1)
        off_diag = jnp.logical_and(col_idx < n_real, row_idx != col_idx)
        pos = jnp.logical_and(same, off_diag)
        a_pos, a_all, a_cnt = acc_pos[...], acc_all[...], acc_cnt[...]
        for c in range(n_slices):                      # lane-parallel VPU accumulation
            sl = slice(c * 128, (c + 1) * 128)
            e_c = e[:, sl]
            od_c = off_diag[:, sl].astype(jnp.float32)
            p_c = pos[:, sl].astype(jnp.float32)
            a_all = a_all + od_c * e_c
            a_pos = a_pos + p_c * e_c
            a_cnt = a_cnt + p_c
        acc_pos[...], acc_all[...], acc_cnt[...] = a_pos, a_all, a_cnt

    @pl.when(jnp.logical_not(boundary))
    def _():
        a_pos, a_all, a_cnt = acc_pos[...], acc_all[...], acc_cnt[...]
        for c in range(n_slices):
            sl = slice(c * 128, (c + 1) * 128)
            e_c = e[:, sl]
            p_c = same[:, sl].astype(jnp.float32)
            a_all = a_all + e_c
            a_pos = a_pos + p_c * e_c
            a_cnt = a_cnt + p_c
        acc_pos[...], acc_all[...], acc_cnt[...] = a_pos, a_all, a_cnt

    @pl.when(j == n_j - 1)
    def _():
        # One cross-lane (128 -> 1) reduction per row tile, done once in the epilogue.
        P = jnp.sum(acc_cnt[...], axis=1, keepdims=True)           # (TQ, 1)
        s_pos = jnp.sum(acc_pos[...], axis=1, keepdims=True)
        s_all = jnp.sum(acc_all[...], axis=1, keepdims=True)
        num = s_pos + (jnp.float32(n_real) - P)                    # masked exp(0)=1 terms
        den = s_all + 1.0                                          # diagonal exp(0)=1
        rid = r0 + lax.broadcasted_iota(jnp.int32, (tq, 1), 0)
        valid = jnp.logical_and(P > 0.0, rid < n_real)
        per_row = (jnp.log(den) - jnp.log(num)) / jnp.maximum(P, 1.0)
        loss_ref[...] = jnp.where(valid, per_row, 0.0)
        valid_ref[...] = valid.astype(jnp.float32)


def supervised_contrastive_loss(features, labels, temperature=0.1,
                                allow_bf16_matmul=False):
    """features: [N, D] float (f32 or bf16), labels: [N] int -> scalar f32 loss.

    NOTE: like the PyTorch reference, this is NaN if no row has a positive pair,
    and exp(sim/T) can overflow f32 for very small temperature (no max-subtraction,
    to match the reference exactly).  Set allow_bf16_matmul=True to trade ~1e-3
    relative error on sim for bf16 MXU throughput on f32 inputs.
    """
    N, D = features.shape
    d_pad = _round_up(D, 128)
    if features.dtype == jnp.bfloat16 or allow_bf16_matmul:
        mxu_dtype = jnp.bfloat16
    else:
        mxu_dtype = jnp.float32
    itemsize = jnp.dtype(mxu_dtype).itemsize
    tq, tk, n_pad = _pick_tiles(N, d_pad, itemsize)
    has_pad = n_pad > N

    # ---- Hoisted O(N*D) preprocessing (single fused XLA ops) ----
    # F.normalize(x, p=2, dim=1): x * rsqrt(max(sumsq, 1e-24)); 1/T folded into rows.
    f = features.astype(jnp.float32)
    inv_norm = lax.rsqrt(jnp.maximum(jnp.sum(f * f, axis=1, keepdims=True), 1e-24))
    fn = f * inv_norm
    lhs = (fn * (1.0 / float(temperature))).astype(mxu_dtype)
    rhs_t = fn.astype(mxu_dtype).T                                  # (D, N), natural MXU RHS

    lhs_p = jnp.zeros((n_pad, d_pad), mxu_dtype).at[:N, :D].set(lhs)
    rhsT_p = jnp.zeros((d_pad, n_pad), mxu_dtype).at[:D, :N].set(rhs_t)

    lab = labels.astype(jnp.int32)
    lab_p = jnp.full((n_pad,), -1, jnp.int32).at[:N].set(lab)
    lab_r = lab_p.reshape(n_pad, 1)
    lab_c = lab_p.reshape(1, n_pad)

    grid = (n_pad // tq, n_pad // tk)

    est = _vmem_estimate(tq, tk, d_pad, itemsize)
    vmem_limit = int(min(max(32 * 1024 * 1024, int(est * 1.5)), 56 * 1024 * 1024))

    kernel = functools.partial(_sup_con_kernel, n_real=N, tq=tq, tk=tk, has_pad=has_pad)

    per_row_loss, per_row_valid = pl.pallas_call(
        kernel,
        out_shape=(jax.ShapeDtypeStruct((n_pad, 1), jnp.float32),
                   jax.ShapeDtypeStruct((n_pad, 1), jnp.float32)),
        grid_spec=pltpu.PrefetchScalarGridSpec(
            num_scalar_prefetch=0,
            grid=grid,
            in_specs=[
                pl.BlockSpec((tq, d_pad), lambda i, j: (i, 0)),   # normalized+scaled rows
                pl.BlockSpec((d_pad, tk), lambda i, j: (0, j)),   # normalized cols, (D, N) layout
                pl.BlockSpec((tq, 1), lambda i, j: (i, 0)),       # row labels
                pl.BlockSpec((1, tk), lambda i, j: (0, j)),       # col labels
            ],
            out_specs=(
                pl.BlockSpec((tq, 1), lambda i, j: (i, 0)),       # per-row loss
                pl.BlockSpec((tq, 1), lambda i, j: (i, 0)),       # per-row validity
            ),
            scratch_shapes=[
                pltpu.VMEM((tq, 128), jnp.float32),   # lane-parallel sum exp over positives
                pltpu.VMEM((tq, 128), jnp.float32),   # lane-parallel sum exp over off-diagonal
                pltpu.VMEM((tq, 128), jnp.float32),   # lane-parallel positive count P
            ],
        ),
        compiler_params=pltpu.CompilerParams(
            dimension_semantics=("parallel", "arbitrary"),
            vmem_limit_bytes=vmem_limit),
    )(lhs_p, rhsT_p, lab_r, lab_c)

    # Mean over rows with at least one positive (NaN if none, like the reference).
    return jnp.sum(per_row_loss) / jnp.sum(per_row_valid)


def _reference_loss(features, labels, temperature=0.1):
    """Pure-JAX re-implementation of the PyTorch forward, for verification."""
    f = features.astype(jnp.float32)
    norm = jnp.sqrt(jnp.sum(f * f, axis=1, keepdims=True))
    f = f / jnp.maximum(norm, 1e-12)
    sim = (f @ f.T) / temperature
    N = f.shape[0]
    same = labels[:, None] == labels[None, :]
    eye = jnp.eye(N, dtype=bool)
    labels_matrix = jnp.logical_and(same, ~eye).astype(jnp.float32)
    mask_non_self = (~eye).astype(jnp.float32)
    num = jnp.sum(jnp.exp(sim * labels_matrix), axis=1)
    den = jnp.sum(jnp.exp(sim * mask_non_self), axis=1)
    P = jnp.sum(labels_matrix, axis=1)
    valid = P > 0
    per_row = jnp.where(valid, -jnp.log(num / den) / jnp.maximum(P, 1.0), 0.0)
    return jnp.sum(per_row) / jnp.sum(valid.astype(jnp.float32))


if __name__ == "__main__":
    key = jax.random.PRNGKey(0)
    k1, k2, k3, k4 = jax.random.split(key, 4)

    # Case 1: tiny shapes (single padded 128x128 tile, boundary-only path).
    N1, D1 = 8, 32
    f1 = jax.random.normal(k1, (N1, D1), dtype=jnp.float32)
    l1 = jax.random.randint(k2, (N1,), 0, 3, dtype=jnp.int32)
    out1 = jax.block_until_ready(supervised_contrastive_loss(f1, l1, temperature=0.1))
    ref1 = jax.block_until_ready(_reference_loss(f1, l1, temperature=0.1))
    assert jnp.allclose(out1, ref1, rtol=1e-4, atol=1e-4), (out1, ref1)

    # Case 2: exercises the multi-tile grid, interior fast path, accumulators and padding.
    N2, D2 = 600, 96
    f2 = jax.random.normal(k3, (N2, D2), dtype=jnp.float32)
    l2 = jax.random.randint(k4, (N2,), 0, 11, dtype=jnp.int32)
    out2 = jax.block_until_ready(supervised_contrastive_loss(f2, l2, temperature=0.1))
    ref2 = jax.block_until_ready(_reference_loss(f2, l2, temperature=0.1))
    assert jnp.allclose(out2, ref2, rtol=1e-4, atol=1e-4), (out2, ref2)

    print("KERNEL_OK")
</pallas_src>

<mosaic_0001>
module attributes {stable_mosaic.version = 11 : i64} {
  func.func @_sup_con_kernel(%arg0: i32, %arg1: i32, %arg2: memref<128x128xf32, #tpu.memory_space<vmem>>, %arg3: memref<128x128xf32, #tpu.memory_space<vmem>>, %arg4: memref<128x1xi32, #tpu.memory_space<vmem>>, %arg5: memref<1x128xi32, #tpu.memory_space<vmem>>, %arg6: memref<128x1xf32, #tpu.memory_space<vmem>>, %arg7: memref<128x1xf32, #tpu.memory_space<vmem>>, %arg8: memref<128x128xf32, #tpu.memory_space<vmem>>, %arg9: memref<128x128xf32, #tpu.memory_space<vmem>>, %arg10: memref<128x128xf32, #tpu.memory_space<vmem>>) attributes {dimension_semantics = [#tpu.dimension_semantics<parallel>, #tpu.dimension_semantics<arbitrary>], iteration_bounds = array<i64: 1, 1>, scalar_prefetch = 0 : i64, scratch_operands = 3 : i64, tpu.core_type = #tpu.core_type<tc>, window_params = [{transform_indices = @transform_0, window_bounds = array<i64: 128, 128>}, {transform_indices = @transform_1, window_bounds = array<i64: 128, 128>}, {transform_indices = @transform_2, window_bounds = array<i64: 128, 1>}, {transform_indices = @transform_3, window_bounds = array<i64: 1, 128>}, {transform_indices = @transform_4, window_bounds = array<i64: 128, 1>}, {transform_indices = @transform_5, window_bounds = array<i64: 128, 1>}]} {
    %c0_i32 = arith.constant 0 : i32
    %0 = arith.cmpi eq, %arg1, %c0_i32 : i32
    %1 = arith.extui %0 : i1 to i32
    %c0_i32_0 = arith.constant 0 : i32
    %2 = arith.cmpi ne, %1, %c0_i32_0 : i32
    scf.if %2 {
      %cst_16 = arith.constant 0.000000e+00 : f32
      %29 = vector.broadcast %cst_16 : f32 to vector<128x128xf32>
      %c0_17 = arith.constant 0 : index
      %c0_18 = arith.constant 0 : index
      %30 = vector.load %arg8[%c0_17, %c0_18] : memref<128x128xf32, #tpu.memory_space<vmem>>, vector<128x128xf32>
      tpu.vector_store %arg8[%c0_17, %c0_18], %29 {strides = array<i32>} : memref<128x128xf32, #tpu.memory_space<vmem>>, vector<128x128xf32>,
      %cst_19 = arith.constant 0.000000e+00 : f32
      %31 = vector.broadcast %cst_19 : f32 to vector<128x128xf32>
      %c0_20 = arith.constant 0 : index
      %c0_21 = arith.constant 0 : index
      %32 = vector.load %arg9[%c0_20, %c0_21] : memref<128x128xf32, #tpu.memory_space<vmem>>, vector<128x128xf32>
      tpu.vector_store %arg9[%c0_20, %c0_21], %31 {strides = array<i32>} : memref<128x128xf32, #tpu.memory_space<vmem>>, vector<128x128xf32>,
      %cst_22 = arith.constant 0.000000e+00 : f32
      %33 = vector.broadcast %cst_22 : f32 to vector<128x128xf32>
      %c0_23 = arith.constant 0 : index
      %c0_24 = arith.constant 0 : index
      %34 = vector.load %arg10[%c0_23, %c0_24] : memref<128x128xf32, #tpu.memory_space<vmem>>, vector<128x128xf32>
      tpu.vector_store %arg10[%c0_23, %c0_24], %33 {strides = array<i32>} : memref<128x128xf32, #tpu.memory_space<vmem>>, vector<128x128xf32>,
    } else {
    }
    %c0 = arith.constant 0 : index
    %c0_1 = arith.constant 0 : index
    %3 = vector.load %arg2[%c0, %c0_1] : memref<128x128xf32, #tpu.memory_space<vmem>>, vector<128x128xf32>
    %c0_2 = arith.constant 0 : index
    %c0_3 = arith.constant 0 : index
    %4 = vector.load %arg3[%c0_2, %c0_3] : memref<128x128xf32, #tpu.memory_space<vmem>>, vector<128x128xf32>
    %cst = arith.constant dense<0.000000e+00> : vector<128x128xf32>
    %5 = tpu.matmul %3, %4, %cst {dimension_numbers = #tpu.dot_dimension_numbers<[1], [0], [0], [1], [0, 0, 1, 1], [], []>} : vector<128x128xf32>, vector<128x128xf32>, vector<128x128xf32> -> vector<128x128xf32>
    %6 = math.exp %5 : vector<128x128xf32>
    %c0_4 = arith.constant 0 : index
    %c0_5 = arith.constant 0 : index
    %7 = vector.load %arg4[%c0_4, %c0_5] : memref<128x1xi32, #tpu.memory_space<vmem>>, vector<128x1xi32>
    %c0_6 = arith.constant 0 : index
    %c0_7 = arith.constant 0 : index
    %8 = vector.load %arg5[%c0_6, %c0_7] : memref<1x128xi32, #tpu.memory_space<vmem>>, vector<1x128xi32>
    %9 = vector.broadcast %7 : vector<128x1xi32> to vector<128x128xi32>
    %10 = vector.broadcast %8 : vector<1x128xi32> to vector<128x128xi32>
    %11 = arith.cmpi eq, %9, %10 : vector<128x128xi32>
    %c128_i32 = arith.constant 128 : i32
    %12 = arith.muli %arg0, %c128_i32 : i32
    %c128_i32_8 = arith.constant 128 : i32
    %13 = arith.muli %arg1, %c128_i32_8 : i32
    %c128_i32_9 = arith.constant 128 : i32
    %14 = arith.addi %13, %c128_i32_9 : i32
    %15 = arith.cmpi slt, %12, %14 : i32
    %c128_i32_10 = arith.constant 128 : i32
    %16 = arith.addi %12, %c128_i32_10 : i32
    %17 = arith.cmpi slt, %13, %16 : i32
    %18 = arith.andi %15, %17 : i1
    %c0_i32_11 = arith.constant 0 : i32
    %19 = arith.cmpi eq, %arg1, %c0_i32_11 : i32
    %20 = arith.ori %18, %19 : i1
    %21 = arith.extui %20 : i1 to i32
    %c0_i32_12 = arith.constant 0 : i32
    %22 = arith.cmpi ne, %21, %c0_i32_12 : i32
    scf.if %22 {
      %29 = tpu.iota {dimensions = array<i32: 0>} : vector<128x128xi32>
      %30 = vector.broadcast %12 : i32 to vector<128x128xi32>
      %31 = arith.addi %30, %29 : vector<128x128xi32>
      %32 = tpu.iota {dimensions = array<i32: 1>} : vector<128x128xi32>
      %33 = vector.broadcast %13 : i32 to vector<128x128xi32>
      %34 = arith.addi %33, %32 : vector<128x128xi32>
      %c8_i32 = arith.constant 8 : i32
      %35 = vector.broadcast %c8_i32 : i32 to vector<128x128xi32>
      %36 = arith.cmpi slt, %34, %35 : vector<128x128xi32>
      %37 = arith.cmpi ne, %31, %34 : vector<128x128xi32>
      %38 = arith.andi %36, %37 : vector<128x128xi1>
      %39 = arith.andi %11, %38 : vector<128x128xi1>
      %c0_16 = arith.constant 0 : index
      %c0_17 = arith.constant 0 : index
      %40 = vector.load %arg8[%c0_16, %c0_17] : memref<128x128xf32, #tpu.memory_space<vmem>>, vector<128x128xf32>
      %c0_18 = arith.constant 0 : index
      %c0_19 = arith.constant 0 : index
      %41 = vector.load %arg9[%c0_18, %c0_19] : memref<128x128xf32, #tpu.memory_space<vmem>>, vector<128x128xf32>
      %c0_20 = arith.constant 0 : index
      %c0_21 = arith.constant 0 : index
      %42 = vector.load %arg10[%c0_20, %c0_21] : memref<128x128xf32, #tpu.memory_space<vmem>>, vector<128x128xf32>
      %43 = arith.extui %38 : vector<128x128xi1> to vector<128x128xi32>
      %44 = arith.sitofp %43 : vector<128x128xi32> to vector<128x128xf32>
      %45 = arith.extui %39 : vector<128x128xi1> to vector<128x128xi32>
      %46 = arith.sitofp %45 : vector<128x128xi32> to vector<128x128xf32>
      %47 = arith.mulf %44, %6 : vector<128x128xf32>
      %48 = arith.addf %41, %47 : vector<128x128xf32>
      %49 = arith.mulf %46, %6 : vector<128x128xf32>
      %50 = arith.addf %40, %49 : vector<128x128xf32>
      %51 = arith.addf %42, %46 : vector<128x128xf32>
      %c0_22 = arith.constant 0 : index
      %c0_23 = arith.constant 0 : index
      %52 = vector.load %arg8[%c0_22, %c0_23] : memref<128x128xf32, #tpu.memory_space<vmem>>, vector<128x128xf32>
      tpu.vector_store %arg8[%c0_22, %c0_23], %50 {strides = array<i32>} : memref<128x128xf32, #tpu.memory_space<vmem>>, vector<128x128xf32>,
      %c0_24 = arith.constant 0 : index
      %c0_25 = arith.constant 0 : index
      %53 = vector.load %arg9[%c0_24, %c0_25] : memref<128x128xf32, #tpu.memory_space<vmem>>, vector<128x128xf32>
      tpu.vector_store %arg9[%c0_24, %c0_25], %48 {strides = array<i32>} : memref<128x128xf32, #tpu.memory_space<vmem>>, vector<128x128xf32>,
      %c0_26 = arith.constant 0 : index
      %c0_27 = arith.constant 0 : index
      %54 = vector.load %arg10[%c0_26, %c0_27] : memref<128x128xf32, #tpu.memory_space<vmem>>, vector<128x128xf32>
      tpu.vector_store %arg10[%c0_26, %c0_27], %51 {strides = array<i32>} : memref<128x128xf32, #tpu.memory_space<vmem>>, vector<128x128xf32>,
    } else {
    }
    %true = arith.constant true
    %23 = arith.xori %20, %true : i1
    %24 = arith.extui %23 : i1 to i32
    %c0_i32_13 = arith.constant 0 : i32
    %25 = arith.cmpi ne, %24, %c0_i32_13 : i32
    scf.if %25 {
      %c0_16 = arith.constant 0 : index
      %c0_17 = arith.constant 0 : index
      %29 = vector.load %arg8[%c0_16, %c0_17] : memref<128x128xf32, #tpu.memory_space<vmem>>, vector<128x128xf32>
      %c0_18 = arith.constant 0 : index
      %c0_19 = arith.constant 0 : index
      %30 = vector.load %arg9[%c0_18, %c0_19] : memref<128x128xf32, #tpu.memory_space<vmem>>, vector<128x128xf32>
      %c0_20 = arith.constant 0 : index
      %c0_21 = arith.constant 0 : index
      %31 = vector.load %arg10[%c0_20, %c0_21] : memref<128x128xf32, #tpu.memory_space<vmem>>, vector<128x128xf32>
      %32 = arith.extui %11 : vector<128x128xi1> to vector<128x128xi32>
      %33 = arith.sitofp %32 : vector<128x128xi32> to vector<128x128xf32>
      %34 = arith.addf %30, %6 : vector<128x128xf32>
      %35 = arith.mulf %33, %6 : vector<128x128xf32>
      %36 = arith.addf %29, %35 : vector<128x128xf32>
      %37 = arith.addf %31, %33 : vector<128x128xf32>
      %c0_22 = arith.constant 0 : index
      %c0_23 = arith.constant 0 : index
      %38 = vector.load %arg8[%c0_22, %c0_23] : memref<128x128xf32, #tpu.memory_space<vmem>>, vector<128x128xf32>
      tpu.vector_store %arg8[%c0_22, %c0_23], %36 {strides = array<i32>} : memref<128x128xf32, #tpu.memory_space<vmem>>, vector<128x128xf32>,
      %c0_24 = arith.constant 0 : index
      %c0_25 = arith.constant 0 : index
      %39 = vector.load %arg9[%c0_24, %c0_25] : memref<128x128xf32, #tpu.memory_space<vmem>>, vector<128x128xf32>
      tpu.vector_store %arg9[%c0_24, %c0_25], %34 {strides = array<i32>} : memref<128x128xf32, #tpu.memory_space<vmem>>, vector<128x128xf32>,
      %c0_26 = arith.constant 0 : index
      %c0_27 = arith.constant 0 : index
      %40 = vector.load %arg10[%c0_26, %c0_27] : memref<128x128xf32, #tpu.memory_space<vmem>>, vector<128x128xf32>
      tpu.vector_store %arg10[%c0_26, %c0_27], %37 {strides = array<i32>} : memref<128x128xf32, #tpu.memory_space<vmem>>, vector<128x128xf32>,
    } else {
    }
    %c0_i32_14 = arith.constant 0 : i32
    %26 = arith.cmpi eq, %arg1, %c0_i32_14 : i32
    %27 = arith.extui %26 : i1 to i32
    %c0_i32_15 = arith.constant 0 : i32
    %28 = arith.cmpi ne, %27, %c0_i32_15 : i32
    scf.if %28 {
      %c0_16 = arith.constant 0 : index
      %c0_17 = arith.constant 0 : index
      %29 = vector.load %arg10[%c0_16, %c0_17] : memref<128x128xf32, #tpu.memory_space<vmem>>, vector<128x128xf32>
      %cst_18 = arith.constant dense<0.000000e+00> : vector<128xf32>
      %30 = vector.multi_reduction <add>, %29, %cst_18 [1] : vector<128x128xf32> to vector<128xf32>
      %31 = vector.shape_cast %30 : vector<128xf32> to vector<128x1xf32>
      %c0_19 = arith.constant 0 : index
      %c0_20 = arith.constant 0 : index
      %32 = vector.load %arg8[%c0_19, %c0_20] : memref<128x128xf32, #tpu.memory_space<vmem>>, vector<128x128xf32>
      %cst_21 = arith.constant dense<0.000000e+00> : vector<128xf32>
      %33 = vector.multi_reduction <add>, %32, %cst_21 [1] : vector<128x128xf32> to vector<128xf32>
      %34 = vector.shape_cast %33 : vector<128xf32> to vector<128x1xf32>
      %c0_22 = arith.constant 0 : index
      %c0_23 = arith.constant 0 : index
      %35 = vector.load %arg9[%c0_22, %c0_23] : memref<128x128xf32, #tpu.memory_space<vmem>>, vector<128x128xf32>
      %cst_24 = arith.constant dense<0.000000e+00> : vector<128xf32>
      %36 = vector.multi_reduction <add>, %35, %cst_24 [1] : vector<128x128xf32> to vector<128xf32>
      %37 = vector.shape_cast %36 : vector<128xf32> to vector<128x1xf32>
      %cst_25 = arith.constant 8.000000e+00 : f32
      %38 = vector.broadcast %cst_25 : f32 to vector<128x1xf32>
      %39 = arith.subf %38, %31 : vector<128x1xf32>
      %40 = arith.addf %34, %39 : vector<128x1xf32>
      %cst_26 = arith.constant 1.000000e+00 : f32
      %41 = vector.broadcast %cst_26 : f32 to vector<128x1xf32>
      %42 = arith.addf %37, %41 : vector<128x1xf32>
      %43 = tpu.iota {dimensions = array<i32: 0>} : vector<128x1xi32>
      %44 = vector.broadcast %12 : i32 to vector<128x1xi32>
      %45 = arith.addi %44, %43 : vector<128x1xi32>
      %cst_27 = arith.constant 0.000000e+00 : f32
      %46 = vector.broadcast %cst_27 : f32 to vector<128x1xf32>
      %47 = arith.cmpf ogt, %31, %46 : vector<128x1xf32>
      %c8_i32 = arith.constant 8 : i32
      %48 = vector.broadcast %c8_i32 : i32 to vector<128x1xi32>
      %49 = arith.cmpi slt, %45, %48 : vector<128x1xi32>
      %50 = arith.andi %47, %49 : vector<128x1xi1>
      %51 = math.log %42 : vector<128x1xf32>
      %52 = math.log %40 : vector<128x1xf32>
      %53 = arith.subf %51, %52 : vector<128x1xf32>
      %cst_28 = arith.constant 1.000000e+00 : f32
      %54 = vector.broadcast %cst_28 : f32 to vector<128x1xf32>
      %55 = arith.maximumf %31, %54 : vector<128x1xf32>
      %56 = arith.divf %53, %55 : vector<128x1xf32>
      %cst_29 = arith.constant 0.000000e+00 : f32
      %57 = vector.broadcast %cst_29 : f32 to vector<128x1xf32>
      %58 = arith.select %50, %56, %57 : vector<128x1xi1>, vector<128x1xf32>
      %c0_30 = arith.constant 0 : index
      %c0_31 = arith.constant 0 : index
      %59 = vector.load %arg6[%c0_30, %c0_31] : memref<128x1xf32, #tpu.memory_space<vmem>>, vector<128x1xf32>
      tpu.vector_store %arg6[%c0_30, %c0_31], %58 {strides = array<i32>} : memref<128x1xf32, #tpu.memory_space<vmem>>, vector<128x1xf32>,
      %60 = arith.extui %50 : vector<128x1xi1> to vector<128x1xi32>
      %61 = arith.sitofp %60 : vector<128x1xi32> to vector<128x1xf32>
      %c0_32 = arith.constant 0 : index
      %c0_33 = arith.constant 0 : index
      %62 = vector.load %arg7[%c0_32, %c0_33] : memref<128x1xf32, #tpu.memory_space<vmem>>, vector<128x1xf32>
      tpu.vector_store %arg7[%c0_32, %c0_33], %61 {strides = array<i32>} : memref<128x1xf32, #tpu.memory_space<vmem>>, vector<128x1xf32>,
    } else {
    }
    return
  }
  func.func @transform_0(%arg0: i32, %arg1: i32) -> (i32, i32) {
    %c0_i32 = arith.constant 0 : i32
    %c0_i32_0 = arith.constant 0 : i32
    return %arg0, %c0_i32 : i32, i32
  }
  func.func @transform_1(%arg0: i32, %arg1: i32) -> (i32, i32) {
    %c0_i32 = arith.constant 0 : i32
    %c0_i32_0 = arith.constant 0 : i32
    return %c0_i32, %arg1 : i32, i32
  }
  func.func @transform_2(%arg0: i32, %arg1: i32) -> (i32, i32) {
    %c0_i32 = arith.constant 0 : i32
    %c0_i32_0 = arith.constant 0 : i32
    return %arg0, %c0_i32 : i32, i32
  }
  func.func @transform_3(%arg0: i32, %arg1: i32) -> (i32, i32) {
    %c0_i32 = arith.constant 0 : i32
    %c0_i32_0 = arith.constant 0 : i32
    return %c0_i32, %arg1 : i32, i32
  }
  func.func @transform_4(%arg0: i32, %arg1: i32) -> (i32, i32) {
    %c0_i32 = arith.constant 0 : i32
    %c0_i32_0 = arith.constant 0 : i32
    return %arg0, %c0_i32 : i32, i32
  }
  func.func @transform_5(%arg0: i32, %arg1: i32) -> (i32, i32) {
    %c0_i32 = arith.constant 0 : i32
    %c0_i32_0 = arith.constant 0 : i32
    return %arg0, %c0_i32 : i32, i32
  }
}

</mosaic_0001>

<llo_original>
// kernel: tpu_custom_call.1
$region0: #{tpu_custom_call.1}
  #allocation0 [shape = 'u32[]', space=smem, size = 0x4, offset = 0x4, fixed_abs, tag = 'smem constant byte address 0x4 - core index']
  #allocation1 [shape = 'u32[144,128]{1,0:T(1,128)}', space=vmem, size = 0x12000, scoped, tag = 'internal scratch']
  #allocation2 [shape = 'f32[128,128]{1,0:T(8,128)}', space=vmem, size = 0x10000, scoped, tag = 'scratch operand']
  #allocation3 [shape = 'f32[128,128]{1,0:T(8,128)}', space=vmem, size = 0x10000, scoped, tag = 'scratch operand']
  #allocation4 [shape = 'f32[128,128]{1,0:T(8,128)}', space=vmem, size = 0x10000, scoped, tag = 'scratch operand']
  %s0 = inlined_call_operand.vmem [shape: f32[128,128], index: 0, kind: input, shape index: {}]
  %s1 = inlined_call_operand.hbm [shape: f32[128,128], index: 1, kind: input, shape index: {}]
  %s2 = inlined_call_operand.vmem [shape: s32[128,1], index: 2, kind: input, shape index: {}]
  %s3 = inlined_call_operand.vmem [shape: s32[1,128], index: 3, kind: input, shape index: {}]
  %s4 = inlined_call_operand.vmem [shape: f32[128,1], index: 4, kind: output, shape index: {0}]
  %s5 = inlined_call_operand.vmem [shape: f32[128,1], index: 5, kind: output, shape index: {1}]
  %6 = xla_tuple %s4, %s5
  %s7 = sld [smem:[#allocation0]]
  $region54: #{tpu_custom_call.1} parent=0
    _
  %s9 = ssub.s32 1, %s7
  %s10 = scalar_select 0, %s9, %s7
  $region1: #{tpu_custom_call.1} parent=0
    #allocation5 [shape = 'u8[65536]{0}', space=vmem, size = 0x10000, scoped, tag = 'input window, operand 1, single buffered']
    #allocation6 [shape = 's32[1]{0}', space=sflag, size = 0x4, scoped, tag = 'scoped memory for tpu_custom_call.1']
    %11 = vsyncpa [#allocation6], 0
    // Predicated region
    $region2: #{tpu_custom_call.1} parent=1 // pred_check
      _
    $region3: #{tpu_custom_call.1} parent=1 // pred_check_branch
      %13 = sbr.rel (0) target = $region5
    $region4: #{tpu_custom_call.1} parent=1 // pred_region
      _
    $region5: #{tpu_custom_call.1} parent=1 // pred_fallthru
      _
    // Predicated region
    $region6: #{tpu_custom_call.1} parent=1 // pred_check
      _
    $region7: #{tpu_custom_call.1} parent=1 // pred_check_branch
      %15 = sbr.rel (0) target = $region9
    $region8: #{tpu_custom_call.1} parent=1 // pred_region
      %s17 = ssub.s32 2048, 2048
      %18 = vsyncadd [#allocation6], %s17
      %s19 = sshll.u32 [#allocation5], 4
      %s20 = int_to_ptr.vmem [resolvable:$true] %s19
      %25 = dma.hbm_to_vmem [thread:$0]  %s1, 2048, %s20, [#allocation6], 128, 128, 8
    $region9: #{tpu_custom_call.1} parent=1 // pred_fallthru
      _
    // Predicated region
    $region10: #{tpu_custom_call.1} parent=1 // pred_check
      _
    $region11: #{tpu_custom_call.1} parent=1 // pred_check_branch
      %27 = sbr.rel (0) target = $region13
    $region12: #{tpu_custom_call.1} parent=1 // pred_region
      _
    $region13: #{tpu_custom_call.1} parent=1 // pred_fallthru
      _
    // Predicated region
    $region14: #{tpu_custom_call.1} parent=1 // pred_check
      _
    $region15: #{tpu_custom_call.1} parent=1 // pred_check_branch
      %29 = sbr.rel (0) target = $region17
    $region16: #{tpu_custom_call.1} parent=1 // pred_region
      _
    $region17: #{tpu_custom_call.1} parent=1 // pred_fallthru
      _
    // Predicated region
    $region18: #{tpu_custom_call.1} parent=1 // pred_check
      _
    $region19: #{tpu_custom_call.1} parent=1 // pred_check_branch
      %31 = sbr.rel (0) target = $region21
    $region20: #{tpu_custom_call.1} parent=1 // pred_region
      %32 = dma.done [#allocation6], 2048
    $region21: #{tpu_custom_call.1} parent=1 // pred_fallthru
      _
    %p33 = scmp.eq.s32.totalorder 0, 0
    // Predicated region
    $region22: #{tpu_custom_call.1} parent=1 // pred_check
      %p34 = pneg %p33
    $region23: #{tpu_custom_call.1} parent=1 // pred_check_branch
      %36 = sbr.rel (%p34) target = $region25
    $region24: #{tpu_custom_call.1} parent=1 // pred_region
      %37 = vst [vmem:[#allocation2] sm:$0xff] 0.0
      %38 = vst [vmem:[#allocation2 + $0x8] sm:$0xff] 0.0
      %39 = vst [vmem:[#allocation2 + $0x10] sm:$0xff] 0.0
      %40 = vst [vmem:[#allocation2 + $0x18] sm:$0xff] 0.0
      %41 = vst [vmem:[#allocation2 + $0x20] sm:$0xff] 0.0
      %42 = vst [vmem:[#allocation2 + $0x28] sm:$0xff] 0.0
      %43 = vst [vmem:[#allocation2 + $0x30] sm:$0xff] 0.0
      %44 = vst [vmem:[#allocation2 + $0x38] sm:$0xff] 0.0
      %45 = vst [vmem:[#allocation2 + $0x40] sm:$0xff] 0.0
      %46 = vst [vmem:[#allocation2 + $0x48] sm:$0xff] 0.0
      %47 = vst [vmem:[#allocation2 + $0x50] sm:$0xff] 0.0
      %48 = vst [vmem:[#allocation2 + $0x58] sm:$0xff] 0.0
      %49 = vst [vmem:[#allocation2 + $0x60] sm:$0xff] 0.0
      %50 = vst [vmem:[#allocation2 + $0x68] sm:$0xff] 0.0
      %51 = vst [vmem:[#allocation2 + $0x70] sm:$0xff] 0.0
      %52 = vst [vmem:[#allocation2 + $0x78] sm:$0xff] 0.0
      %53 = vst [vmem:[#allocation3] sm:$0xff] 0.0
      %54 = vst [vmem:[#allocation3 + $0x8] sm:$0xff] 0.0
      %55 = vst [vmem:[#allocation3 + $0x10] sm:$0xff] 0.0
      %56 = vst [vmem:[#allocation3 + $0x18] sm:$0xff] 0.0
      %57 = vst [vmem:[#allocation3 + $0x20] sm:$0xff] 0.0
      %58 = vst [vmem:[#allocation3 + $0x28] sm:$0xff] 0.0
      %59 = vst [vmem:[#allocation3 + $0x30] sm:$0xff] 0.0
      %60 = vst [vmem:[#allocation3 + $0x38] sm:$0xff] 0.0
      %61 = vst [vmem:[#allocation3 + $0x40] sm:$0xff] 0.0
      %62 = vst [vmem:[#allocation3 + $0x48] sm:$0xff] 0.0
      %63 = vst [vmem:[#allocation3 + $0x50] sm:$0xff] 0.0
      %64 = vst [vmem:[#allocation3 + $0x58] sm:$0xff] 0.0
      %65 = vst [vmem:[#allocation3 + $0x60] sm:$0xff] 0.0
      %66 = vst [vmem:[#allocation3 + $0x68] sm:$0xff] 0.0
      %67 = vst [vmem:[#allocation3 + $0x70] sm:$0xff] 0.0
      %68 = vst [vmem:[#allocation3 + $0x78] sm:$0xff] 0.0
      %69 = vst [vmem:[#allocation4] sm:$0xff] 0.0
      %70 = vst [vmem:[#allocation4 + $0x8] sm:$0xff] 0.0
      %71 = vst [vmem:[#allocation4 + $0x10] sm:$0xff] 0.0
      %72 = vst [vmem:[#allocation4 + $0x18] sm:$0xff] 0.0
      %73 = vst [vmem:[#allocation4 + $0x20] sm:$0xff] 0.0
      %74 = vst [vmem:[#allocation4 + $0x28] sm:$0xff] 0.0
      %75 = vst [vmem:[#allocation4 + $0x30] sm:$0xff] 0.0
      %76 = vst [vmem:[#allocation4 + $0x38] sm:$0xff] 0.0
      %77 = vst [vmem:[#allocation4 + $0x40] sm:$0xff] 0.0
      %78 = vst [vmem:[#allocation4 + $0x48] sm:$0xff] 0.0
      %79 = vst [vmem:[#allocation4 + $0x50] sm:$0xff] 0.0
      %80 = vst [vmem:[#allocation4 + $0x58] sm:$0xff] 0.0
      %81 = vst [vmem:[#allocation4 + $0x60] sm:$0xff] 0.0
      %82 = vst [vmem:[#allocation4 + $0x68] sm:$0xff] 0.0
      %83 = vst [vmem:[#allocation4 + $0x70] sm:$0xff] 0.0
      %84 = vst [vmem:[#allocation4 + $0x78] sm:$0xff] 0.0
    $region25: #{tpu_custom_call.1} parent=1 // pred_fallthru
      _
    %v85 = vld [vmem:[%s0] sm:$0xff]
    %v86 = vld [vmem:[%s0 + $0x8] sm:$0xff]
    %v87 = vld [vmem:[%s0 + $0x10] sm:$0xff]
    %v88 = vld [vmem:[%s0 + $0x18] sm:$0xff]
    %v89 = vld [vmem:[%s0 + $0x20] sm:$0xff]
    %v90 = vld [vmem:[%s0 + $0x28] sm:$0xff]
    %v91 = vld [vmem:[%s0 + $0x30] sm:$0xff]
    %v92 = vld [vmem:[%s0 + $0x38] sm:$0xff]
    %v93 = vld [vmem:[%s0 + $0x40] sm:$0xff]
    %v94 = vld [vmem:[%s0 + $0x48] sm:$0xff]
    %v95 = vld [vmem:[%s0 + $0x50] sm:$0xff]
    %v96 = vld [vmem:[%s0 + $0x58] sm:$0xff]
    %v97 = vld [vmem:[%s0 + $0x60] sm:$0xff]
    %v98 = vld [vmem:[%s0 + $0x68] sm:$0xff]
    %v99 = vld [vmem:[%s0 + $0x70] sm:$0xff]
    %v100 = vld [vmem:[%s0 + $0x78] sm:$0xff]
    %v101 = vld [vmem:[#allocation5] sm:$0xff]
    %v102 = vld [vmem:[#allocation5 + $0x8] sm:$0xff]
    %v103 = vld [vmem:[#allocation5 + $0x10] sm:$0xff]
    %v104 = vld [vmem:[#allocation5 + $0x18] sm:$0xff]
    %v105 = vld [vmem:[#allocation5 + $0x20] sm:$0xff]
    %v106 = vld [vmem:[#allocation5 + $0x28] sm:$0xff]
    %v107 = vld [vmem:[#allocation5 + $0x30] sm:$0xff]
    %v108 = vld [vmem:[#allocation5 + $0x38] sm:$0xff]
    %v109 = vld [vmem:[#allocation5 + $0x40] sm:$0xff]
    %v110 = vld [vmem:[#allocation5 + $0x48] sm:$0xff]
    %v111 = vld [vmem:[#allocation5 + $0x50] sm:$0xff]
    %v112 = vld [vmem:[#allocation5 + $0x58] sm:$0xff]
    %v113 = vld [vmem:[#allocation5 + $0x60] sm:$0xff]
    %v114 = vld [vmem:[#allocation5 + $0x68] sm:$0xff]
    %v115 = vld [vmem:[#allocation5 + $0x70] sm:$0xff]
    %v116 = vld [vmem:[#allocation5 + $0x78] sm:$0xff]
    %117 = vmatprep.subr.mxu0 0.0
    %118 = vmatpush1.msra.mxu0 %v101
    %119 = vmatprep.subr.mxu0 0.0
    %120 = vmatpush1.msra.mxu0 %v102
    %121 = vmatprep.subr.mxu0 0.0
    %122 = vmatpush1.msra.mxu0 %v103
    %123 = vmatprep.subr.mxu0 0.0
    %124 = vmatpush1.msra.mxu0 %v104
    %125 = vmatprep.subr.mxu0 0.0
    %126 = vmatpush1.msra.mxu0 %v105
    %127 = vmatprep.subr.mxu0 0.0
    %128 = vmatpush1.msra.mxu0 %v106
    %129 = vmatprep.subr.mxu0 0.0
    %130 = vmatpush1.msra.mxu0 %v107
    %131 = vmatprep.subr.mxu0 0.0
    %132 = vmatpush1.msra.mxu0 %v108
    %133 = vmatprep.subr.mxu0 0.0
    %134 = vmatpush1.msra.mxu0 %v109
    %135 = vmatprep.subr.mxu0 0.0
    %136 = vmatpush1.msra.mxu0 %v110
    %137 = vmatprep.subr.mxu0 0.0
    %138 = vmatpush1.msra.mxu0 %v111
    %139 = vmatprep.subr.mxu0 0.0
    %140 = vmatpush1.msra.mxu0 %v112
    %141 = vmatprep.subr.mxu0 0.0
    %142 = vmatpush1.msra.mxu0 %v113
    %143 = vmatprep.subr.mxu0 0.0
    %144 = vmatpush1.msra.mxu0 %v114
    %145 = vmatprep.subr.mxu0 0.0
    %146 = vmatpush1.msra.mxu0 %v115
    %147 = vmatprep.subr.mxu0 0.0
    %148 = vmatpush1.msra.mxu0 %v116
    %149 = vmatprep.subr.mxu0 0.0
    %150 = vmatpush1.msra.mxu0 0.0
    %151 = vmatprep.subr.mxu0 0.0
    %152 = vmatpush1.msra.mxu0 0.0
    %153 = vmatprep.subr.mxu0 0.0
    %154 = vmatpush1.msra.mxu0 0.0
    %155 = vmatprep.subr.mxu0 0.0
    %156 = vmatpush1.msra.mxu0 0.0
    %157 = vmatprep.subr.mxu0 0.0
    %158 = vmatpush1.msra.mxu0 0.0
    %159 = vmatprep.subr.mxu0 0.0
    %160 = vmatpush1.msra.mxu0 0.0
    %161 = vmatprep.subr.mxu0 0.0
    %162 = vmatpush1.msra.mxu0 0.0
    %163 = vmatprep.subr.mxu0 0.0
    %164 = vmatpush1.msra.mxu0 0.0
    %165 = vmatprep.subr.mxu0 0.0
    %166 = vmatpush1.msra.mxu0 0.0
    %167 = vmatprep.subr.mxu0 0.0
    %168 = vmatpush1.msra.mxu0 0.0
    %169 = vmatprep.subr.mxu0 0.0
    %170 = vmatpush1.msra.mxu0 0.0
    %171 = vmatprep.subr.mxu0 0.0
    %172 = vmatpush1.msra.mxu0 0.0
    %173 = vmatprep.subr.mxu0 0.0
    %174 = vmatpush1.msra.mxu0 0.0
    %175 = vmatprep.subr.mxu0 0.0
    %176 = vmatpush1.msra.mxu0 0.0
    %177 = vmatprep.subr.mxu0 0.0
    %178 = vmatpush1.msra.mxu0 0.0
    %179 = vmatprep.subr.mxu0 0.0
    %180 = vmatpush1.msra.mxu0 0.0
    %181 = vmatprep.mubr.f32.mxu0 0.0
    %182 = vmatmul.mubr.f32.gmra.mrb[0].mxu0 %v85
    %v183 = vpop.f32.mrb[0].mxu0
    %v184 = vadd.f32 0.0, %v183
    %v185 = vpop.f32.mrb[0].mxu0
    %186 = vmatprep.mubr.f32.mxu0 0.0
    %187 = vmatmul.mubr.f32.gmra.mrb[0].mxu0 %v86
    %v188 = vpop.f32.mrb[0].mxu0
    %v189 = vadd.f32 0.0, %v188
    %v190 = vpop.f32.mrb[0].mxu0
    %191 = vmatprep.mubr.f32.mxu0 0.0
    %192 = vmatmul.mubr.f32.gmra.mrb[0].mxu0 %v87
    %v193 = vpop.f32.mrb[0].mxu0
    %v194 = vadd.f32 0.0, %v193
    %v195 = vpop.f32.mrb[0].mxu0
    %196 = vmatprep.mubr.f32.mxu0 0.0
    %197 = vmatmul.mubr.f32.gmra.mrb[0].mxu0 %v88
    %v198 = vpop.f32.mrb[0].mxu0
    %v199 = vadd.f32 0.0, %v198
    %v200 = vpop.f32.mrb[0].mxu0
    %201 = vmatprep.mubr.f32.mxu0 0.0
    %202 = vmatmul.mubr.f32.gmra.mrb[0].mxu0 %v89
    %v203 = vpop.f32.mrb[0].mxu0
    %v204 = vadd.f32 0.0, %v203
    %v205 = vpop.f32.mrb[0].mxu0
    %206 = vmatprep.mubr.f32.mxu0 0.0
    %207 = vmatmul.mubr.f32.gmra.mrb[0].mxu0 %v90
    %v208 = vpop.f32.mrb[0].mxu0
    %v209 = vadd.f32 0.0, %v208
    %v210 = vpop.f32.mrb[0].mxu0
    %211 = vmatprep.mubr.f32.mxu0 0.0
    %212 = vmatmul.mubr.f32.gmra.mrb[0].mxu0 %v91
    %v213 = vpop.f32.mrb[0].mxu0
    %v214 = vadd.f32 0.0, %v213
    %v215 = vpop.f32.mrb[0].mxu0
    %216 = vmatprep.mubr.f32.mxu0 0.0
    %217 = vmatmul.mubr.f32.gmra.mrb[0].mxu0 %v92
    %v218 = vpop.f32.mrb[0].mxu0
    %v219 = vadd.f32 0.0, %v218
    %v220 = vpop.f32.mrb[0].mxu0
    %221 = vmatprep.mubr.f32.mxu0 0.0
    %222 = vmatmul.mubr.f32.gmra.mrb[0].mxu0 %v93
    %v223 = vpop.f32.mrb[0].mxu0
    %v224 = vadd.f32 0.0, %v223
    %v225 = vpop.f32.mrb[0].mxu0
    %226 = vmatprep.mubr.f32.mxu0 0.0
    %227 = vmatmul.mubr.f32.gmra.mrb[0].mxu0 %v94
    %v228 = vpop.f32.mrb[0].mxu0
    %v229 = vadd.f32 0.0, %v228
    %v230 = vpop.f32.mrb[0].mxu0
    %231 = vmatprep.mubr.f32.mxu0 0.0
    %232 = vmatmul.mubr.f32.gmra.mrb[0].mxu0 %v95
    %v233 = vpop.f32.mrb[0].mxu0
    %v234 = vadd.f32 0.0, %v233
    %v235 = vpop.f32.mrb[0].mxu0
    %236 = vmatprep.mubr.f32.mxu0 0.0
    %237 = vmatmul.mubr.f32.gmra.mrb[0].mxu0 %v96
    %v238 = vpop.f32.mrb[0].mxu0
    %v239 = vadd.f32 0.0, %v238
    %v240 = vpop.f32.mrb[0].mxu0
    %241 = vmatprep.mubr.f32.mxu0 0.0
    %242 = vmatmul.mubr.f32.gmra.mrb[0].mxu0 %v97
    %v243 = vpop.f32.mrb[0].mxu0
    %v244 = vadd.f32 0.0, %v243
    %v245 = vpop.f32.mrb[0].mxu0
    %246 = vmatprep.mubr.f32.mxu0 0.0
    %247 = vmatmul.mubr.f32.gmra.mrb[0].mxu0 %v98
    %v248 = vpop.f32.mrb[0].mxu0
    %v249 = vadd.f32 0.0, %v248
    %v250 = vpop.f32.mrb[0].mxu0
    %251 = vmatprep.mubr.f32.mxu0 0.0
    %252 = vmatmul.mubr.f32.gmra.mrb[0].mxu0 %v99
    %v253 = vpop.f32.mrb[0].mxu0
    %v254 = vadd.f32 0.0, %v253
    %v255 = vpop.f32.mrb[0].mxu0
    %256 = vmatprep.mubr.f32.mxu0 0.0
    %257 = vmatmul.mubr.f32.gmra.mrb[0].mxu0 %v100
    %v258 = vpop.f32.mrb[0].mxu0
    %v259 = vadd.f32 0.0, %v258
    %v260 = vpop.f32.mrb[0].mxu0
    %261 = vdwg.mxu0
    %v262 = vmul.f32 %v184, 1.442695
    %v263 = vpow.pop %v262
    %v264 = vmul.f32 %v189, 1.442695
    %v265 = vpow.pop %v264
    %v266 = vmul.f32 %v194, 1.442695
    %v267 = vpow.pop %v266
    %v268 = vmul.f32 %v199, 1.442695
    %v269 = vpow.pop %v268
    %v270 = vmul.f32 %v204, 1.442695
    %v271 = vpow.pop %v270
    %v272 = vmul.f32 %v209, 1.442695
    %v273 = vpow.pop %v272
    %v274 = vmul.f32 %v214, 1.442695
    %v275 = vpow.pop %v274
    %v276 = vmul.f32 %v219, 1.442695
    %v277 = vpow.pop %v276
    %v278 = vmul.f32 %v224, 1.442695
    %v279 = vpow.pop %v278
    %v280 = vmul.f32 %v229, 1.442695
    %v281 = vpow.pop %v280
    %v282 = vmul.f32 %v234, 1.442695
    %v283 = vpow.pop %v282
    %v284 = vmul.f32 %v239, 1.442695
    %v285 = vpow.pop %v284
    %v286 = vmul.f32 %v244, 1.442695
    %v287 = vpow.pop %v286
    %v288 = vmul.f32 %v249, 1.442695
    %v289 = vpow.pop %v288
    %v290 = vmul.f32 %v254, 1.442695
    %v291 = vpow.pop %v290
    %v292 = vmul.f32 %v259, 1.442695
    %v293 = vpow.pop %v292
    %v294 = vld [vmem:[%s2] sm:$0xff]
    %v295 = vld [vmem:[%s2 + $0x8] sm:$0xff]
    %v296 = vld [vmem:[%s2 + $0x10] sm:$0xff]
    %v297 = vld [vmem:[%s2 + $0x18] sm:$0xff]
    %v298 = vld [vmem:[%s2 + $0x20] sm:$0xff]
    %v299 = vld [vmem:[%s2 + $0x28] sm:$0xff]
    %v300 = vld [vmem:[%s2 + $0x30] sm:$0xff]
    %v301 = vld [vmem:[%s2 + $0x38] sm:$0xff]
    %v302 = vld [vmem:[%s2 + $0x40] sm:$0xff]
    %v303 = vld [vmem:[%s2 + $0x48] sm:$0xff]
    %v304 = vld [vmem:[%s2 + $0x50] sm:$0xff]
    %v305 = vld [vmem:[%s2 + $0x58] sm:$0xff]
    %v306 = vld [vmem:[%s2 + $0x60] sm:$0xff]
    %v307 = vld [vmem:[%s2 + $0x68] sm:$0xff]
    %v308 = vld [vmem:[%s2 + $0x70] sm:$0xff]
    %v309 = vld [vmem:[%s2 + $0x78] sm:$0xff]
    %v310 = vld [vmem:[%s3] sm:$0x1]
    %311 = vset.pattern.permute.xlu0 0
    %312 = vperm.xlu0 %311, %v294
    %v313 = vpop.permute.xlu0 %312
    %314 = vset.pattern.permute.xlu0 0
    %315 = vperm.xlu0 %314, %v295
    %v316 = vpop.permute.xlu0 %315
    %317 = vset.pattern.permute.xlu0 0
    %318 = vperm.xlu0 %317, %v296
    %v319 = vpop.permute.xlu0 %318
    %320 = vset.pattern.permute.xlu0 0
    %321 = vperm.xlu0 %320, %v297
    %v322 = vpop.permute.xlu0 %321
    %323 = vset.pattern.permute.xlu0 0
    %324 = vperm.xlu0 %323, %v298
    %v325 = vpop.permute.xlu0 %324
    %326 = vset.pattern.permute.xlu0 0
    %327 = vperm.xlu0 %326, %v299
    %v328 = vpop.permute.xlu0 %327
    %329 = vset.pattern.permute.xlu0 0
    %330 = vperm.xlu0 %329, %v300
    %v331 = vpop.permute.xlu0 %330
    %332 = vset.pattern.permute.xlu0 0
    %333 = vperm.xlu0 %332, %v301
    %v334 = vpop.permute.xlu0 %333
    %335 = vset.pattern.permute.xlu0 0
    %336 = vperm.xlu0 %335, %v302
    %v337 = vpop.permute.xlu0 %336
    %338 = vset.pattern.permute.xlu0 0
    %339 = vperm.xlu0 %338, %v303
    %v340 = vpop.permute.xlu0 %339
    %341 = vset.pattern.permute.xlu0 0
    %342 = vperm.xlu0 %341, %v304
    %v343 = vpop.permute.xlu0 %342
    %344 = vset.pattern.permute.xlu0 0
    %345 = vperm.xlu0 %344, %v305
    %v346 = vpop.permute.xlu0 %345
    %347 = vset.pattern.permute.xlu0 0
    %348 = vperm.xlu0 %347, %v306
    %v349 = vpop.permute.xlu0 %348
    %350 = vset.pattern.permute.xlu0 0
    %351 = vperm.xlu0 %350, %v307
    %v352 = vpop.permute.xlu0 %351
    %353 = vset.pattern.permute.xlu0 0
    %354 = vperm.xlu0 %353, %v308
    %v355 = vpop.permute.xlu0 %354
    %356 = vset.pattern.permute.xlu0 0
    %357 = vperm.xlu0 %356, %v309
    %v358 = vpop.permute.xlu0 %357
    %v359 = vlaneseq
    %v360 = vshrl.u32 %v359, 7
    %v361 = vsub.s32 0, %v360
    %v362 = vrot.slane %v310, %v361
    %vm363 = vcmp.eq.s32.totalorder %v313, %v362
    %vm364 = vcmp.eq.s32.totalorder %v316, %v362
    %vm365 = vcmp.eq.s32.totalorder %v319, %v362
    %vm366 = vcmp.eq.s32.totalorder %v322, %v362
    %vm367 = vcmp.eq.s32.totalorder %v325, %v362
    %vm368 = vcmp.eq.s32.totalorder %v328, %v362
    %vm369 = vcmp.eq.s32.totalorder %v331, %v362
    %vm370 = vcmp.eq.s32.totalorder %v334, %v362
    %vm371 = vcmp.eq.s32.totalorder %v337, %v362
    %vm372 = vcmp.eq.s32.totalorder %v340, %v362
    %vm373 = vcmp.eq.s32.totalorder %v343, %v362
    %vm374 = vcmp.eq.s32.totalorder %v346, %v362
    %vm375 = vcmp.eq.s32.totalorder %v349, %v362
    %vm376 = vcmp.eq.s32.totalorder %v352, %v362
    %vm377 = vcmp.eq.s32.totalorder %v355, %v362
    %vm378 = vcmp.eq.s32.totalorder %v358, %v362
    %s379 = smul.u32 0, 128
    %s380 = smul.u32 0, 128
    %s381 = sadd.s32 %s380, 128
    %p382 = scmp.lt.s32.totalorder %s379, %s381
    %s383 = sadd.s32 %s379, 128
    %p384 = scmp.lt.s32.totalorder %s380, %s383
    %p385 = pnand %p382, %p384
    %p386 = pneg %p385
    %p387 = por %p386, %p33
    // Predicated region
    $region26: #{tpu_custom_call.1} parent=1 // pred_check
      %p388 = pneg %p387
    $region27: #{tpu_custom_call.1} parent=1 // pred_check_branch
      %390 = sbr.rel (%p388) target = $region29
    $region28: #{tpu_custom_call.1} parent=1 // pred_region
      %v391 = vlaneseq
      %v392 = vshrl.u32 %v391, 7
      %v393 = vadd.s32 %v392, 8
      %v394 = vadd.s32 %v392, 16
      %v395 = vadd.s32 %v392, 24
      %v396 = vadd.s32 %v392, 32
      %v397 = vadd.s32 %v392, 40
      %v398 = vadd.s32 %v392, 48
      %v399 = vadd.s32 %v392, 56
      %v400 = vadd.s32 %v392, 64
      %v401 = vadd.s32 %v392, 72
      %v402 = vadd.s32 %v392, 80
      %v403 = vadd.s32 %v392, 88
      %v404 = vadd.s32 %v392, 96
      %v405 = vadd.s32 %v392, 104
      %v406 = vadd.s32 %v392, 112
      %v407 = vadd.s32 %v392, 120
      %v408 = vstv %s379
      %v409 = vadd.s32 %v408, %v392
      %v410 = vadd.s32 %v408, %v393
      %v411 = vadd.s32 %v408, %v394
      %v412 = vadd.s32 %v408, %v395
      %v413 = vadd.s32 %v408, %v396
      %v414 = vadd.s32 %v408, %v397
      %v415 = vadd.s32 %v408, %v398
      %v416 = vadd.s32 %v408, %v399
      %v417 = vadd.s32 %v408, %v400
      %v418 = vadd.s32 %v408, %v401
      %v419 = vadd.s32 %v408, %v402
      %v420 = vadd.s32 %v408, %v403
      %v421 = vadd.s32 %v408, %v404
      %v422 = vadd.s32 %v408, %v405
      %v423 = vadd.s32 %v408, %v406
      %v424 = vadd.s32 %v408, %v407
      %v425 = vlaneseq
      %v426 = vand.u32 %v425, 127
      %v427 = vstv %s380
      %v428 = vadd.s32 %v427, %v426
      %vm429 = vcmp.lt.s32.totalorder %v428, 8
      %vm430 = vcmp.ne.s32.totalorder %v409, %v428
      %vm431 = vcmp.ne.s32.totalorder %v410, %v428
      %vm432 = vcmp.ne.s32.totalorder %v411, %v428
      %vm433 = vcmp.ne.s32.totalorder %v412, %v428
      %vm434 = vcmp.ne.s32.totalorder %v413, %v428
      %vm435 = vcmp.ne.s32.totalorder %v414, %v428
      %vm436 = vcmp.ne.s32.totalorder %v415, %v428
      %vm437 = vcmp.ne.s32.totalorder %v416, %v428
      %vm438 = vcmp.ne.s32.totalorder %v417, %v428
      %vm439 = vcmp.ne.s32.totalorder %v418, %v428
      %vm440 = vcmp.ne.s32.totalorder %v419, %v428
      %vm441 = vcmp.ne.s32.totalorder %v420, %v428
      %vm442 = vcmp.ne.s32.totalorder %v421, %v428
      %vm443 = vcmp.ne.s32.totalorder %v422, %v428
      %vm444 = vcmp.ne.s32.totalorder %v423, %v428
      %vm445 = vcmp.ne.s32.totalorder %v424, %v428
      %vm446 = vmand %vm429, %vm430
      %vm447 = vmand %vm429, %vm431
      %vm448 = vmand %vm429, %vm432
      %vm449 = vmand %vm429, %vm433
      %vm450 = vmand %vm429, %vm434
      %vm451 = vmand %vm429, %vm435
      %vm452 = vmand %vm429, %vm436
      %vm453 = vmand %vm429, %vm437
      %vm454 = vmand %vm429, %vm438
      %vm455 = vmand %vm429, %vm439
      %vm456 = vmand %vm429, %vm440
      %vm457 = vmand %vm429, %vm441
      %vm458 = vmand %vm429, %vm442
      %vm459 = vmand %vm429, %vm443
      %vm460 = vmand %vm429, %vm444
      %vm461 = vmand %vm429, %vm445
      %vm462 = vmand %vm363, %vm446
      %vm463 = vmand %vm364, %vm447
      %vm464 = vmand %vm365, %vm448
      %vm465 = vmand %vm366, %vm449
      %vm466 = vmand %vm367, %vm450
      %vm467 = vmand %vm368, %vm451
      %vm468 = vmand %vm369, %vm452
      %vm469 = vmand %vm370, %vm453
      %vm470 = vmand %vm371, %vm454
      %vm471 = vmand %vm372, %vm455
      %vm472 = vmand %vm373, %vm456
      %vm473 = vmand %vm374, %vm457
      %vm474 = vmand %vm375, %vm458
      %vm475 = vmand %vm376, %vm459
      %vm476 = vmand %vm377, %vm460
      %vm477 = vmand %vm378, %vm461
      %v478 = vld [vmem:[#allocation2] sm:$0xff]
      %v479 = vld [vmem:[#allocation2 + $0x8] sm:$0xff]
      %v480 = vld [vmem:[#allocation2 + $0x10] sm:$0xff]
      %v481 = vld [vmem:[#allocation2 + $0x18] sm:$0xff]
      %v482 = vld [vmem:[#allocation2 + $0x20] sm:$0xff]
      %v483 = vld [vmem:[#allocation2 + $0x28] sm:$0xff]
      %v484 = vld [vmem:[#allocation2 + $0x30] sm:$0xff]
      %v485 = vld [vmem:[#allocation2 + $0x38] sm:$0xff]
      %v486 = vld [vmem:[#allocation2 + $0x40] sm:$0xff]
      %v487 = vld [vmem:[#allocation2 + $0x48] sm:$0xff]
      %v488 = vld [vmem:[#allocation2 + $0x50] sm:$0xff]
      %v489 = vld [vmem:[#allocation2 + $0x58] sm:$0xff]
      %v490 = vld [vmem:[#allocation2 + $0x60] sm:$0xff]
      %v491 = vld [vmem:[#allocation2 + $0x68] sm:$0xff]
      %v492 = vld [vmem:[#allocation2 + $0x70] sm:$0xff]
      %v493 = vld [vmem:[#allocation2 + $0x78] sm:$0xff]
      %v494 = vld [vmem:[#allocation3] sm:$0xff]
      %v495 = vld [vmem:[#allocation3 + $0x8] sm:$0xff]
      %v496 = vld [vmem:[#allocation3 + $0x10] sm:$0xff]
      %v497 = vld [vmem:[#allocation3 + $0x18] sm:$0xff]
      %v498 = vld [vmem:[#allocation3 + $0x20] sm:$0xff]
      %v499 = vld [vmem:[#allocation3 + $0x28] sm:$0xff]
      %v500 = vld [vmem:[#allocation3 + $0x30] sm:$0xff]
      %v501 = vld [vmem:[#allocation3 + $0x38] sm:$0xff]
      %v502 = vld [vmem:[#allocation3 + $0x40] sm:$0xff]
      %v503 = vld [vmem:[#allocation3 + $0x48] sm:$0xff]
      %v504 = vld [vmem:[#allocation3 + $0x50] sm:$0xff]
      %v505 = vld [vmem:[#allocation3 + $0x58] sm:$0xff]
      %v506 = vld [vmem:[#allocation3 + $0x60] sm:$0xff]
      %v507 = vld [vmem:[#allocation3 + $0x68] sm:$0xff]
      %v508 = vld [vmem:[#allocation3 + $0x70] sm:$0xff]
      %v509 = vld [vmem:[#allocation3 + $0x78] sm:$0xff]
      %v510 = vld [vmem:[#allocation4] sm:$0xff]
      %v511 = vld [vmem:[#allocation4 + $0x8] sm:$0xff]
      %v512 = vld [vmem:[#allocation4 + $0x10] sm:$0xff]
      %v513 = vld [vmem:[#allocation4 + $0x18] sm:$0xff]
      %v514 = vld [vmem:[#allocation4 + $0x20] sm:$0xff]
      %v515 = vld [vmem:[#allocation4 + $0x28] sm:$0xff]
      %v516 = vld [vmem:[#allocation4 + $0x30] sm:$0xff]
      %v517 = vld [vmem:[#allocation4 + $0x38] sm:$0xff]
      %v518 = vld [vmem:[#allocation4 + $0x40] sm:$0xff]
      %v519 = vld [vmem:[#allocation4 + $0x48] sm:$0xff]
      %v520 = vld [vmem:[#allocation4 + $0x50] sm:$0xff]
      %v521 = vld [vmem:[#allocation4 + $0x58] sm:$0xff]
      %v522 = vld [vmem:[#allocation4 + $0x60] sm:$0xff]
      %v523 = vld [vmem:[#allocation4 + $0x68] sm:$0xff]
      %v524 = vld [vmem:[#allocation4 + $0x70] sm:$0xff]
      %v525 = vld [vmem:[#allocation4 + $0x78] sm:$0xff]
      %v526 = vsel %vm446, 1, 0
      %v527 = vsel %vm447, 1, 0
      %v528 = vsel %vm448, 1, 0
      %v529 = vsel %vm449, 1, 0
      %v530 = vsel %vm450, 1, 0
      %v531 = vsel %vm451, 1, 0
      %v532 = vsel %vm452, 1, 0
      %v533 = vsel %vm453, 1, 0
      %v534 = vsel %vm454, 1, 0
      %v535 = vsel %vm455, 1, 0
      %v536 = vsel %vm456, 1, 0
      %v537 = vsel %vm457, 1, 0
      %v538 = vsel %vm458, 1, 0
      %v539 = vsel %vm459, 1, 0
      %v540 = vsel %vm460, 1, 0
      %v541 = vsel %vm461, 1, 0
      %v542 = vcvt.s32.f32 %v526
      %v543 = vcvt.s32.f32 %v527
      %v544 = vcvt.s32.f32 %v528
      %v545 = vcvt.s32.f32 %v529
      %v546 = vcvt.s32.f32 %v530
      %v547 = vcvt.s32.f32 %v531
      %v548 = vcvt.s32.f32 %v532
      %v549 = vcvt.s32.f32 %v533
      %v550 = vcvt.s32.f32 %v534
      %v551 = vcvt.s32.f32 %v535
      %v552 = vcvt.s32.f32 %v536
      %v553 = vcvt.s32.f32 %v537
      %v554 = vcvt.s32.f32 %v538
      %v555 = vcvt.s32.f32 %v539
      %v556 = vcvt.s32.f32 %v540
      %v557 = vcvt.s32.f32 %v541
      %v558 = vsel %vm462, 1, 0
      %v559 = vsel %vm463, 1, 0
      %v560 = vsel %vm464, 1, 0
      %v561 = vsel %vm465, 1, 0
      %v562 = vsel %vm466, 1, 0
      %v563 = vsel %vm467, 1, 0
      %v564 = vsel %vm468, 1, 0
      %v565 = vsel %vm469, 1, 0
      %v566 = vsel %vm470, 1, 0
      %v567 = vsel %vm471, 1, 0
      %v568 = vsel %vm472, 1, 0
      %v569 = vsel %vm473, 1, 0
      %v570 = vsel %vm474, 1, 0
      %v571 = vsel %vm475, 1, 0
      %v572 = vsel %vm476, 1, 0
      %v573 = vsel %vm477, 1, 0
      %v574 = vcvt.s32.f32 %v558
      %v575 = vcvt.s32.f32 %v559
      %v576 = vcvt.s32.f32 %v560
      %v577 = vcvt.s32.f32 %v561
      %v578 = vcvt.s32.f32 %v562
      %v579 = vcvt.s32.f32 %v563
      %v580 = vcvt.s32.f32 %v564
      %v581 = vcvt.s32.f32 %v565
      %v582 = vcvt.s32.f32 %v566
      %v583 = vcvt.s32.f32 %v567
      %v584 = vcvt.s32.f32 %v568
      %v585 = vcvt.s32.f32 %v569
      %v586 = vcvt.s32.f32 %v570
      %v587 = vcvt.s32.f32 %v571
      %v588 = vcvt.s32.f32 %v572
      %v589 = vcvt.s32.f32 %v573
      %v590 = vmul.f32 %v542, %v263
      %v591 = vmul.f32 %v543, %v265
      %v592 = vmul.f32 %v544, %v267
      %v593 = vmul.f32 %v545, %v269
      %v594 = vmul.f32 %v546, %v271
      %v595 = vmul.f32 %v547, %v273
      %v596 = vmul.f32 %v548, %v275
      %v597 = vmul.f32 %v549, %v277
      %v598 = vmul.f32 %v550, %v279
      %v599 = vmul.f32 %v551, %v281
      %v600 = vmul.f32 %v552, %v283
      %v601 = vmul.f32 %v553, %v285
      %v602 = vmul.f32 %v554, %v287
      %v603 = vmul.f32 %v555, %v289
      %v604 = vmul.f32 %v556, %v291
      %v605 = vmul.f32 %v557, %v293
      %v606 = vadd.f32 %v494, %v590
      %v607 = vadd.f32 %v495, %v591
      %v608 = vadd.f32 %v496, %v592
      %v609 = vadd.f32 %v497, %v593
      %v610 = vadd.f32 %v498, %v594
      %v611 = vadd.f32 %v499, %v595
      %v612 = vadd.f32 %v500, %v596
      %v613 = vadd.f32 %v501, %v597
      %v614 = vadd.f32 %v502, %v598
      %v615 = vadd.f32 %v503, %v599
      %v616 = vadd.f32 %v504, %v600
      %v617 = vadd.f32 %v505, %v601
      %v618 = vadd.f32 %v506, %v602
      %v619 = vadd.f32 %v507, %v603
      %v620 = vadd.f32 %v508, %v604
      %v621 = vadd.f32 %v509, %v605
      %v622 = vmul.f32 %v574, %v263
      %v623 = vmul.f32 %v575, %v265
      %v624 = vmul.f32 %v576, %v267
      %v625 = vmul.f32 %v577, %v269
      %v626 = vmul.f32 %v578, %v271
      %v627 = vmul.f32 %v579, %v273
      %v628 = vmul.f32 %v580, %v275
      %v629 = vmul.f32 %v581, %v277
      %v630 = vmul.f32 %v582, %v279
      %v631 = vmul.f32 %v583, %v281
      %v632 = vmul.f32 %v584, %v283
      %v633 = vmul.f32 %v585, %v285
      %v634 = vmul.f32 %v586, %v287
      %v635 = vmul.f32 %v587, %v289
      %v636 = vmul.f32 %v588, %v291
      %v637 = vmul.f32 %v589, %v293
      %v638 = vadd.f32 %v478, %v622
      %v639 = vadd.f32 %v479, %v623
      %v640 = vadd.f32 %v480, %v624
      %v641 = vadd.f32 %v481, %v625
      %v642 = vadd.f32 %v482, %v626
      %v643 = vadd.f32 %v483, %v627
      %v644 = vadd.f32 %v484, %v628
      %v645 = vadd.f32 %v485, %v629
      %v646 = vadd.f32 %v486, %v630
      %v647 = vadd.f32 %v487, %v631
      %v648 = vadd.f32 %v488, %v632
      %v649 = vadd.f32 %v489, %v633
      %v650 = vadd.f32 %v490, %v634
      %v651 = vadd.f32 %v491, %v635
      %v652 = vadd.f32 %v492, %v636
      %v653 = vadd.f32 %v493, %v637
      %v654 = vadd.f32 %v510, %v574
      %v655 = vadd.f32 %v511, %v575
      %v656 = vadd.f32 %v512, %v576
      %v657 = vadd.f32 %v513, %v577
      %v658 = vadd.f32 %v514, %v578
      %v659 = vadd.f32 %v515, %v579
      %v660 = vadd.f32 %v516, %v580
      %v661 = vadd.f32 %v517, %v581
      %v662 = vadd.f32 %v518, %v582
      %v663 = vadd.f32 %v519, %v583
      %v664 = vadd.f32 %v520, %v584
      %v665 = vadd.f32 %v521, %v585
      %v666 = vadd.f32 %v522, %v586
      %v667 = vadd.f32 %v523, %v587
      %v668 = vadd.f32 %v524, %v588
      %v669 = vadd.f32 %v525, %v589
      %670 = vst [vmem:[#allocation2] sm:$0xff] %v638
      %671 = vst [vmem:[#allocation2 + $0x8] sm:$0xff] %v639
      %672 = vst [vmem:[#allocation2 + $0x10] sm:$0xff] %v640
      %673 = vst [vmem:[#allocation2 + $0x18] sm:$0xff] %v641
      %674 = vst [vmem:[#allocation2 + $0x20] sm:$0xff] %v642
      %675 = vst [vmem:[#allocation2 + $0x28] sm:$0xff] %v643
      %676 = vst [vmem:[#allocation2 + $0x30] sm:$0xff] %v644
      %677 = vst [vmem:[#allocation2 + $0x38] sm:$0xff] %v645
      %678 = vst [vmem:[#allocation2 + $0x40] sm:$0xff] %v646
      %679 = vst [vmem:[#allocation2 + $0x48] sm:$0xff] %v647
      %680 = vst [vmem:[#allocation2 + $0x50] sm:$0xff] %v648
      %681 = vst [vmem:[#allocation2 + $0x58] sm:$0xff] %v649
      %682 = vst [vmem:[#allocation2 + $0x60] sm:$0xff] %v650
      %683 = vst [vmem:[#allocation2 + $0x68] sm:$0xff] %v651
      %684 = vst [vmem:[#allocation2 + $0x70] sm:$0xff] %v652
      %685 = vst [vmem:[#allocation2 + $0x78] sm:$0xff] %v653
      %686 = vst [vmem:[#allocation3] sm:$0xff] %v606
      %687 = vst [vmem:[#allocation3 + $0x8] sm:$0xff] %v607
      %688 = vst [vmem:[#allocation3 + $0x10] sm:$0xff] %v608
      %689 = vst [vmem:[#allocation3 + $0x18] sm:$0xff] %v609
      %690 = vst [vmem:[#allocation3 + $0x20] sm:$0xff] %v610
      %691 = vst [vmem:[#allocation3 + $0x28] sm:$0xff] %v611
      %692 = vst [vmem:[#allocation3 + $0x30] sm:$0xff] %v612
      %693 = vst [vmem:[#allocation3 + $0x38] sm:$0xff] %v613
      %694 = vst [vmem:[#allocation3 + $0x40] sm:$0xff] %v614
      %695 = vst [vmem:[#allocation3 + $0x48] sm:$0xff] %v615
      %696 = vst [vmem:[#allocation3 + $0x50] sm:$0xff] %v616
      %697 = vst [vmem:[#allocation3 + $0x58] sm:$0xff] %v617
      %698 = vst [vmem:[#allocation3 + $0x60] sm:$0xff] %v618
      %699 = vst [vmem:[#allocation3 + $0x68] sm:$0xff] %v619
      %700 = vst [vmem:[#allocation3 + $0x70] sm:$0xff] %v620
      %701 = vst [vmem:[#allocation3 + $0x78] sm:$0xff] %v621
      %702 = vst [vmem:[#allocation4] sm:$0xff] %v654
      %703 = vst [vmem:[#allocation4 + $0x8] sm:$0xff] %v655
      %704 = vst [vmem:[#allocation4 + $0x10] sm:$0xff] %v656
      %705 = vst [vmem:[#allocation4 + $0x18] sm:$0xff] %v657
      %706 = vst [vmem:[#allocation4 + $0x20] sm:$0xff] %v658
      %707 = vst [vmem:[#allocation4 + $0x28] sm:$0xff] %v659
      %708 = vst [vmem:[#allocation4 + $0x30] sm:$0xff] %v660
      %709 = vst [vmem:[#allocation4 + $0x38] sm:$0xff] %v661
      %710 = vst [vmem:[#allocation4 + $0x40] sm:$0xff] %v662
      %711 = vst [vmem:[#allocation4 + $0x48] sm:$0xff] %v663
      %712 = vst [vmem:[#allocation4 + $0x50] sm:$0xff] %v664
      %713 = vst [vmem:[#allocation4 + $0x58] sm:$0xff] %v665
      %714 = vst [vmem:[#allocation4 + $0x60] sm:$0xff] %v666
      %715 = vst [vmem:[#allocation4 + $0x68] sm:$0xff] %v667
      %716 = vst [vmem:[#allocation4 + $0x70] sm:$0xff] %v668
      %717 = vst [vmem:[#allocation4 + $0x78] sm:$0xff] %v669
    $region29: #{tpu_custom_call.1} parent=1 // pred_fallthru
      _
    %p718 = pneg %p387
    // Predicated region
    $region30: #{tpu_custom_call.1} parent=1 // pred_check
      _
    $region31: #{tpu_custom_call.1} parent=1 // pred_check_branch
      %720 = sbr.rel (%p387) target = $region33
    $region32: #{tpu_custom_call.1} parent=1 // pred_region
      %v721 = vld [vmem:[#allocation2] sm:$0xff]
      %v722 = vld [vmem:[#allocation2 + $0x8] sm:$0xff]
      %v723 = vld [vmem:[#allocation2 + $0x10] sm:$0xff]
      %v724 = vld [vmem:[#allocation2 + $0x18] sm:$0xff]
      %v725 = vld [vmem:[#allocation2 + $0x20] sm:$0xff]
      %v726 = vld [vmem:[#allocation2 + $0x28] sm:$0xff]
      %v727 = vld [vmem:[#allocation2 + $0x30] sm:$0xff]
      %v728 = vld [vmem:[#allocation2 + $0x38] sm:$0xff]
      %v729 = vld [vmem:[#allocation2 + $0x40] sm:$0xff]
      %v730 = vld [vmem:[#allocation2 + $0x48] sm:$0xff]
      %v731 = vld [vmem:[#allocation2 + $0x50] sm:$0xff]
      %v732 = vld [vmem:[#allocation2 + $0x58] sm:$0xff]
      %v733 = vld [vmem:[#allocation2 + $0x60] sm:$0xff]
      %v734 = vld [vmem:[#allocation2 + $0x68] sm:$0xff]
      %v735 = vld [vmem:[#allocation2 + $0x70] sm:$0xff]
      %v736 = vld [vmem:[#allocation2 + $0x78] sm:$0xff]
      %v737 = vld [vmem:[#allocation3] sm:$0xff]
      %v738 = vld [vmem:[#allocation3 + $0x8] sm:$0xff]
      %v739 = vld [vmem:[#allocation3 + $0x10] sm:$0xff]
      %v740 = vld [vmem:[#allocation3 + $0x18] sm:$0xff]
      %v741 = vld [vmem:[#allocation3 + $0x20] sm:$0xff]
      %v742 = vld [vmem:[#allocation3 + $0x28] sm:$0xff]
      %v743 = vld [vmem:[#allocation3 + $0x30] sm:$0xff]
      %v744 = vld [vmem:[#allocation3 + $0x38] sm:$0xff]
      %v745 = vld [vmem:[#allocation3 + $0x40] sm:$0xff]
      %v746 = vld [vmem:[#allocation3 + $0x48] sm:$0xff]
      %v747 = vld [vmem:[#allocation3 + $0x50] sm:$0xff]
      %v748 = vld [vmem:[#allocation3 + $0x58] sm:$0xff]
      %v749 = vld [vmem:[#allocation3 + $0x60] sm:$0xff]
      %v750 = vld [vmem:[#allocation3 + $0x68] sm:$0xff]
      %v751 = vld [vmem:[#allocation3 + $0x70] sm:$0xff]
      %v752 = vld [vmem:[#allocation3 + $0x78] sm:$0xff]
      %v753 = vld [vmem:[#allocation4] sm:$0xff]
      %v754 = vld [vmem:[#allocation4 + $0x8] sm:$0xff]
      %v755 = vld [vmem:[#allocation4 + $0x10] sm:$0xff]
      %v756 = vld [vmem:[#allocation4 + $0x18] sm:$0xff]
      %v757 = vld [vmem:[#allocation4 + $0x20] sm:$0xff]
      %v758 = vld [vmem:[#allocation4 + $0x28] sm:$0xff]
      %v759 = vld [vmem:[#allocation4 + $0x30] sm:$0xff]
      %v760 = vld [vmem:[#allocation4 + $0x38] sm:$0xff]
      %v761 = vld [vmem:[#allocation4 + $0x40] sm:$0xff]
      %v762 = vld [vmem:[#allocation4 + $0x48] sm:$0xff]
      %v763 = vld [vmem:[#allocation4 + $0x50] sm:$0xff]
      %v764 = vld [vmem:[#allocation4 + $0x58] sm:$0xff]
      %v765 = vld [vmem:[#allocation4 + $0x60] sm:$0xff]
      %v766 = vld [vmem:[#allocation4 + $0x68] sm:$0xff]
      %v767 = vld [vmem:[#allocation4 + $0x70] sm:$0xff]
      %v768 = vld [vmem:[#allocation4 + $0x78] sm:$0xff]
      %v769 = vsel %vm363, 1, 0
      %v770 = vsel %vm364, 1, 0
      %v771 = vsel %vm365, 1, 0
      %v772 = vsel %vm366, 1, 0
      %v773 = vsel %vm367, 1, 0
      %v774 = vsel %vm368, 1, 0
      %v775 = vsel %vm369, 1, 0
      %v776 = vsel %vm370, 1, 0
      %v777 = vsel %vm371, 1, 0
      %v778 = vsel %vm372, 1, 0
      %v779 = vsel %vm373, 1, 0
      %v780 = vsel %vm374, 1, 0
      %v781 = vsel %vm375, 1, 0
      %v782 = vsel %vm376, 1, 0
      %v783 = vsel %vm377, 1, 0
      %v784 = vsel %vm378, 1, 0
      %v785 = vcvt.s32.f32 %v769
      %v786 = vcvt.s32.f32 %v770
      %v787 = vcvt.s32.f32 %v771
      %v788 = vcvt.s32.f32 %v772
      %v789 = vcvt.s32.f32 %v773
      %v790 = vcvt.s32.f32 %v774
      %v791 = vcvt.s32.f32 %v775
      %v792 = vcvt.s32.f32 %v776
      %v793 = vcvt.s32.f32 %v777
      %v794 = vcvt.s32.f32 %v778
      %v795 = vcvt.s32.f32 %v779
      %v796 = vcvt.s32.f32 %v780
      %v797 = vcvt.s32.f32 %v781
      %v798 = vcvt.s32.f32 %v782
      %v799 = vcvt.s32.f32 %v783
      %v800 = vcvt.s32.f32 %v784
      %v801 = vadd.f32 %v737, %v263
      %v802 = vadd.f32 %v738, %v265
      %v803 = vadd.f32 %v739, %v267
      %v804 = vadd.f32 %v740, %v269
      %v805 = vadd.f32 %v741, %v271
      %v806 = vadd.f32 %v742, %v273
      %v807 = vadd.f32 %v743, %v275
      %v808 = vadd.f32 %v744, %v277
      %v809 = vadd.f32 %v745, %v279
      %v810 = vadd.f32 %v746, %v281
      %v811 = vadd.f32 %v747, %v283
      %v812 = vadd.f32 %v748, %v285
      %v813 = vadd.f32 %v749, %v287
      %v814 = vadd.f32 %v750, %v289
      %v815 = vadd.f32 %v751, %v291
      %v816 = vadd.f32 %v752, %v293
      %v817 = vmul.f32 %v785, %v263
      %v818 = vmul.f32 %v786, %v265
      %v819 = vmul.f32 %v787, %v267
      %v820 = vmul.f32 %v788, %v269
      %v821 = vmul.f32 %v789, %v271
      %v822 = vmul.f32 %v790, %v273
      %v823 = vmul.f32 %v791, %v275
      %v824 = vmul.f32 %v792, %v277
      %v825 = vmul.f32 %v793, %v279
      %v826 = vmul.f32 %v794, %v281
      %v827 = vmul.f32 %v795, %v283
      %v828 = vmul.f32 %v796, %v285
      %v829 = vmul.f32 %v797, %v287
      %v830 = vmul.f32 %v798, %v289
      %v831 = vmul.f32 %v799, %v291
      %v832 = vmul.f32 %v800, %v293
      %v833 = vadd.f32 %v721, %v817
      %v834 = vadd.f32 %v722, %v818
      %v835 = vadd.f32 %v723, %v819
      %v836 = vadd.f32 %v724, %v820
      %v837 = vadd.f32 %v725, %v821
      %v838 = vadd.f32 %v726, %v822
      %v839 = vadd.f32 %v727, %v823
      %v840 = vadd.f32 %v728, %v824
      %v841 = vadd.f32 %v729, %v825
      %v842 = vadd.f32 %v730, %v826
      %v843 = vadd.f32 %v731, %v827
      %v844 = vadd.f32 %v732, %v828
      %v845 = vadd.f32 %v733, %v829
      %v846 = vadd.f32 %v734, %v830
      %v847 = vadd.f32 %v735, %v831
      %v848 = vadd.f32 %v736, %v832
      %v849 = vadd.f32 %v753, %v785
      %v850 = vadd.f32 %v754, %v786
      %v851 = vadd.f32 %v755, %v787
      %v852 = vadd.f32 %v756, %v788
      %v853 = vadd.f32 %v757, %v789
      %v854 = vadd.f32 %v758, %v790
      %v855 = vadd.f32 %v759, %v791
      %v856 = vadd.f32 %v760, %v792
      %v857 = vadd.f32 %v761, %v793
      %v858 = vadd.f32 %v762, %v794
      %v859 = vadd.f32 %v763, %v795
      %v860 = vadd.f32 %v764, %v796
      %v861 = vadd.f32 %v765, %v797
      %v862 = vadd.f32 %v766, %v798
      %v863 = vadd.f32 %v767, %v799
      %v864 = vadd.f32 %v768, %v800
      %865 = vst [vmem:[#allocation2] sm:$0xff] %v833
      %866 = vst [vmem:[#allocation2 + $0x8] sm:$0xff] %v834
      %867 = vst [vmem:[#allocation2 + $0x10] sm:$0xff] %v835
      %868 = vst [vmem:[#allocation2 + $0x18] sm:$0xff] %v836
      %869 = vst [vmem:[#allocation2 + $0x20] sm:$0xff] %v837
      %870 = vst [vmem:[#allocation2 + $0x28] sm:$0xff] %v838
      %871 = vst [vmem:[#allocation2 + $0x30] sm:$0xff] %v839
      %872 = vst [vmem:[#allocation2 + $0x38] sm:$0xff] %v840
      %873 = vst [vmem:[#allocation2 + $0x40] sm:$0xff] %v841
      %874 = vst [vmem:[#allocation2 + $0x48] sm:$0xff] %v842
      %875 = vst [vmem:[#allocation2 + $0x50] sm:$0xff] %v843
      %876 = vst [vmem:[#allocation2 + $0x58] sm:$0xff] %v844
      %877 = vst [vmem:[#allocation2 + $0x60] sm:$0xff] %v845
      %878 = vst [vmem:[#allocation2 + $0x68] sm:$0xff] %v846
      %879 = vst [vmem:[#allocation2 + $0x70] sm:$0xff] %v847
      %880 = vst [vmem:[#allocation2 + $0x78] sm:$0xff] %v848
      %881 = vst [vmem:[#allocation3] sm:$0xff] %v801
      %882 = vst [vmem:[#allocation3 + $0x8] sm:$0xff] %v802
      %883 = vst [vmem:[#allocation3 + $0x10] sm:$0xff] %v803
      %884 = vst [vmem:[#allocation3 + $0x18] sm:$0xff] %v804
      %885 = vst [vmem:[#allocation3 + $0x20] sm:$0xff] %v805
      %886 = vst [vmem:[#allocation3 + $0x28] sm:$0xff] %v806
      %887 = vst [vmem:[#allocation3 + $0x30] sm:$0xff] %v807
      %888 = vst [vmem:[#allocation3 + $0x38] sm:$0xff] %v808
      %889 = vst [vmem:[#allocation3 + $0x40] sm:$0xff] %v809
      %890 = vst [vmem:[#allocation3 + $0x48] sm:$0xff] %v810
      %891 = vst [vmem:[#allocation3 + $0x50] sm:$0xff] %v811
      %892 = vst [vmem:[#allocation3 + $0x58] sm:$0xff] %v812
      %893 = vst [vmem:[#allocation3 + $0x60] sm:$0xff] %v813
      %894 = vst [vmem:[#allocation3 + $0x68] sm:$0xff] %v814
      %895 = vst [vmem:[#allocation3 + $0x70] sm:$0xff] %v815
      %896 = vst [vmem:[#allocation3 + $0x78] sm:$0xff] %v816
      %897 = vst [vmem:[#allocation4] sm:$0xff] %v849
      %898 = vst [vmem:[#allocation4 + $0x8] sm:$0xff] %v850
      %899 = vst [vmem:[#allocation4 + $0x10] sm:$0xff] %v851
      %900 = vst [vmem:[#allocation4 + $0x18] sm:$0xff] %v852
      %901 = vst [vmem:[#allocation4 + $0x20] sm:$0xff] %v853
      %902 = vst [vmem:[#allocation4 + $0x28] sm:$0xff] %v854
      %903 = vst [vmem:[#allocation4 + $0x30] sm:$0xff] %v855
      %904 = vst [vmem:[#allocation4 + $0x38] sm:$0xff] %v856
      %905 = vst [vmem:[#allocation4 + $0x40] sm:$0xff] %v857
      %906 = vst [vmem:[#allocation4 + $0x48] sm:$0xff] %v858
      %907 = vst [vmem:[#allocation4 + $0x50] sm:$0xff] %v859
      %908 = vst [vmem:[#allocation4 + $0x58] sm:$0xff] %v860
      %909 = vst [vmem:[#allocation4 + $0x60] sm:$0xff] %v861
      %910 = vst [vmem:[#allocation4 + $0x68] sm:$0xff] %v862
      %911 = vst [vmem:[#allocation4 + $0x70] sm:$0xff] %v863
      %912 = vst [vmem:[#allocation4 + $0x78] sm:$0xff] %v864
    $region33: #{tpu_custom_call.1} parent=1 // pred_fallthru
      _
    // Predicated region
    $region34: #{tpu_custom_call.1} parent=1 // pred_check
      %p913 = pneg %p33
    $region35: #{tpu_custom_call.1} parent=1 // pred_check_branch
      %915 = sbr.rel (%p913) target = $region37
    $region36: #{tpu_custom_call.1} parent=1 // pred_region
      %v916 = vld [vmem:[#allocation4] sm:$0xff]
      %v917 = vld [vmem:[#allocation4 + $0x8] sm:$0xff]
      %v918 = vld [vmem:[#allocation4 + $0x10] sm:$0xff]
      %v919 = vld [vmem:[#allocation4 + $0x18] sm:$0xff]
      %v920 = vld [vmem:[#allocation4 + $0x20] sm:$0xff]
      %v921 = vld [vmem:[#allocation4 + $0x28] sm:$0xff]
      %v922 = vld [vmem:[#allocation4 + $0x30] sm:$0xff]
      %v923 = vld [vmem:[#allocation4 + $0x38] sm:$0xff]
      %v924 = vld [vmem:[#allocation4 + $0x40] sm:$0xff]
      %v925 = vld [vmem:[#allocation4 + $0x48] sm:$0xff]
      %v926 = vld [vmem:[#allocation4 + $0x50] sm:$0xff]
      %v927 = vld [vmem:[#allocation4 + $0x58] sm:$0xff]
      %v928 = vld [vmem:[#allocation4 + $0x60] sm:$0xff]
      %v929 = vld [vmem:[#allocation4 + $0x68] sm:$0xff]
      %v930 = vld [vmem:[#allocation4 + $0x70] sm:$0xff]
      %v931 = vld [vmem:[#allocation4 + $0x78] sm:$0xff]
      %932 = vadd.xlane.f32.xlu0 %v916
      %v933 = vpop.xlane.xlu0 %932
      %934 = vadd.xlane.f32.xlu0 %v917
      %v935 = vpop.xlane.xlu0 %934
      %936 = vadd.xlane.f32.xlu0 %v918
      %v937 = vpop.xlane.xlu0 %936
      %938 = vadd.xlane.f32.xlu0 %v919
      %v939 = vpop.xlane.xlu0 %938
      %940 = vadd.xlane.f32.xlu0 %v920
      %v941 = vpop.xlane.xlu0 %940
      %942 = vadd.xlane.f32.xlu0 %v921
      %v943 = vpop.xlane.xlu0 %942
      %944 = vadd.xlane.f32.xlu0 %v922
      %v945 = vpop.xlane.xlu0 %944
      %946 = vadd.xlane.f32.xlu0 %v923
      %v947 = vpop.xlane.xlu0 %946
      %948 = vadd.xlane.f32.xlu0 %v924
      %v949 = vpop.xlane.xlu0 %948
      %950 = vadd.xlane.f32.xlu0 %v925
      %v951 = vpop.xlane.xlu0 %950
      %952 = vadd.xlane.f32.xlu0 %v926
      %v953 = vpop.xlane.xlu0 %952
      %954 = vadd.xlane.f32.xlu0 %v927
      %v955 = vpop.xlane.xlu0 %954
      %956 = vadd.xlane.f32.xlu0 %v928
      %v957 = vpop.xlane.xlu0 %956
      %958 = vadd.xlane.f32.xlu0 %v929
      %v959 = vpop.xlane.xlu0 %958
      %960 = vadd.xlane.f32.xlu0 %v930
      %v961 = vpop.xlane.xlu0 %960
      %962 = vadd.xlane.f32.xlu0 %v931
      %v963 = vpop.xlane.xlu0 %962
      %v964 = vld [vmem:[#allocation2] sm:$0xff]
      %v965 = vld [vmem:[#allocation2 + $0x8] sm:$0xff]
      %v966 = vld [vmem:[#allocation2 + $0x10] sm:$0xff]
      %v967 = vld [vmem:[#allocation2 + $0x18] sm:$0xff]
      %v968 = vld [vmem:[#allocation2 + $0x20] sm:$0xff]
      %v969 = vld [vmem:[#allocation2 + $0x28] sm:$0xff]
      %v970 = vld [vmem:[#allocation2 + $0x30] sm:$0xff]
      %v971 = vld [vmem:[#allocation2 + $0x38] sm:$0xff]
      %v972 = vld [vmem:[#allocation2 + $0x40] sm:$0xff]
      %v973 = vld [vmem:[#allocation2 + $0x48] sm:$0xff]
      %v974 = vld [vmem:[#allocation2 + $0x50] sm:$0xff]
      %v975 = vld [vmem:[#allocation2 + $0x58] sm:$0xff]
      %v976 = vld [vmem:[#allocation2 + $0x60] sm:$0xff]
      %v977 = vld [vmem:[#allocation2 + $0x68] sm:$0xff]
      %v978 = vld [vmem:[#allocation2 + $0x70] sm:$0xff]
      %v979 = vld [vmem:[#allocation2 + $0x78] sm:$0xff]
      %980 = vadd.xlane.f32.xlu0 %v964
      %v981 = vpop.xlane.xlu0 %980
      %982 = vadd.xlane.f32.xlu0 %v965
      %v983 = vpop.xlane.xlu0 %982
      %984 = vadd.xlane.f32.xlu0 %v966
      %v985 = vpop.xlane.xlu0 %984
      %986 = vadd.xlane.f32.xlu0 %v967
      %v987 = vpop.xlane.xlu0 %986
      %988 = vadd.xlane.f32.xlu0 %v968
      %v989 = vpop.xlane.xlu0 %988
      %990 = vadd.xlane.f32.xlu0 %v969
      %v991 = vpop.xlane.xlu0 %990
      %992 = vadd.xlane.f32.xlu0 %v970
      %v993 = vpop.xlane.xlu0 %992
      %994 = vadd.xlane.f32.xlu0 %v971
      %v995 = vpop.xlane.xlu0 %994
      %996 = vadd.xlane.f32.xlu0 %v972
      %v997 = vpop.xlane.xlu0 %996
      %998 = vadd.xlane.f32.xlu0 %v973
      %v999 = vpop.xlane.xlu0 %998
      %1000 = vadd.xlane.f32.xlu0 %v974
      %v1001 = vpop.xlane.xlu0 %1000
      %1002 = vadd.xlane.f32.xlu0 %v975
      %v1003 = vpop.xlane.xlu0 %1002
      %1004 = vadd.xlane.f32.xlu0 %v976
      %v1005 = vpop.xlane.xlu0 %1004
      %1006 = vadd.xlane.f32.xlu0 %v977
      %v1007 = vpop.xlane.xlu0 %1006
      %1008 = vadd.xlane.f32.xlu0 %v978
      %v1009 = vpop.xlane.xlu0 %1008
      %1010 = vadd.xlane.f32.xlu0 %v979
      %v1011 = vpop.xlane.xlu0 %1010
      %v1012 = vld [vmem:[#allocation3] sm:$0xff]
      %v1013 = vld [vmem:[#allocation3 + $0x8] sm:$0xff]
      %v1014 = vld [vmem:[#allocation3 + $0x10] sm:$0xff]
      %v1015 = vld [vmem:[#allocation3 + $0x18] sm:$0xff]
      %v1016 = vld [vmem:[#allocation3 + $0x20] sm:$0xff]
      %v1017 = vld [vmem:[#allocation3 + $0x28] sm:$0xff]
      %v1018 = vld [vmem:[#allocation3 + $0x30] sm:$0xff]
      %v1019 = vld [vmem:[#allocation3 + $0x38] sm:$0xff]
      %v1020 = vld [vmem:[#allocation3 + $0x40] sm:$0xff]
      %v1021 = vld [vmem:[#allocation3 + $0x48] sm:$0xff]
      %v1022 = vld [vmem:[#allocation3 + $0x50] sm:$0xff]
      %v1023 = vld [vmem:[#allocation3 + $0x58] sm:$0xff]
      %v1024 = vld [vmem:[#allocation3 + $0x60] sm:$0xff]
      %v1025 = vld [vmem:[#allocation3 + $0x68] sm:$0xff]
      %v1026 = vld [vmem:[#allocation3 + $0x70] sm:$0xff]
      %v1027 = vld [vmem:[#allocation3 + $0x78] sm:$0xff]
      %1028 = vadd.xlane.f32.xlu0 %v1012
      %v1029 = vpop.xlane.xlu0 %1028
      %1030 = vadd.xlane.f32.xlu0 %v1013
      %v1031 = vpop.xlane.xlu0 %1030
      %1032 = vadd.xlane.f32.xlu0 %v1014
      %v1033 = vpop.xlane.xlu0 %1032
      %1034 = vadd.xlane.f32.xlu0 %v1015
      %v1035 = vpop.xlane.xlu0 %1034
      %1036 = vadd.xlane.f32.xlu0 %v1016
      %v1037 = vpop.xlane.xlu0 %1036
      %1038 = vadd.xlane.f32.xlu0 %v1017
      %v1039 = vpop.xlane.xlu0 %1038
      %1040 = vadd.xlane.f32.xlu0 %v1018
      %v1041 = vpop.xlane.xlu0 %1040
      %1042 = vadd.xlane.f32.xlu0 %v1019
      %v1043 = vpop.xlane.xlu0 %1042
      %1044 = vadd.xlane.f32.xlu0 %v1020
      %v1045 = vpop.xlane.xlu0 %1044
      %1046 = vadd.xlane.f32.xlu0 %v1021
      %v1047 = vpop.xlane.xlu0 %1046
      %1048 = vadd.xlane.f32.xlu0 %v1022
      %v1049 = vpop.xlane.xlu0 %1048
      %1050 = vadd.xlane.f32.xlu0 %v1023
      %v1051 = vpop.xlane.xlu0 %1050
      %1052 = vadd.xlane.f32.xlu0 %v1024
      %v1053 = vpop.xlane.xlu0 %1052
      %1054 = vadd.xlane.f32.xlu0 %v1025
      %v1055 = vpop.xlane.xlu0 %1054
      %1056 = vadd.xlane.f32.xlu0 %v1026
      %v1057 = vpop.xlane.xlu0 %1056
      %1058 = vadd.xlane.f32.xlu0 %v1027
      %v1059 = vpop.xlane.xlu0 %1058
      %v1060 = vsub.f32 8.0, %v933
      %v1061 = vsub.f32 8.0, %v935
      %v1062 = vsub.f32 8.0, %v937
      %v1063 = vsub.f32 8.0, %v939
      %v1064 = vsub.f32 8.0, %v941
      %v1065 = vsub.f32 8.0, %v943
      %v1066 = vsub.f32 8.0, %v945
      %v1067 = vsub.f32 8.0, %v947
      %v1068 = vsub.f32 8.0, %v949
      %v1069 = vsub.f32 8.0, %v951
      %v1070 = vsub.f32 8.0, %v953
      %v1071 = vsub.f32 8.0, %v955
      %v1072 = vsub.f32 8.0, %v957
      %v1073 = vsub.f32 8.0, %v959
      %v1074 = vsub.f32 8.0, %v961
      %v1075 = vsub.f32 8.0, %v963
      %v1076 = vadd.f32 %v981, %v1060
      %v1077 = vadd.f32 %v983, %v1061
      %v1078 = vadd.f32 %v985, %v1062
      %v1079 = vadd.f32 %v987, %v1063
      %v1080 = vadd.f32 %v989, %v1064
      %v1081 = vadd.f32 %v991, %v1065
      %v1082 = vadd.f32 %v993, %v1066
      %v1083 = vadd.f32 %v995, %v1067
      %v1084 = vadd.f32 %v997, %v1068
      %v1085 = vadd.f32 %v999, %v1069
      %v1086 = vadd.f32 %v1001, %v1070
      %v1087 = vadd.f32 %v1003, %v1071
      %v1088 = vadd.f32 %v1005, %v1072
      %v1089 = vadd.f32 %v1007, %v1073
      %v1090 = vadd.f32 %v1009, %v1074
      %v1091 = vadd.f32 %v1011, %v1075
      %v1092 = vadd.f32 %v1029, 1.0
      %v1093 = vadd.f32 %v1031, 1.0
      %v1094 = vadd.f32 %v1033, 1.0
      %v1095 = vadd.f32 %v1035, 1.0
      %v1096 = vadd.f32 %v1037, 1.0
      %v1097 = vadd.f32 %v1039, 1.0
      %v1098 = vadd.f32 %v1041, 1.0
      %v1099 = vadd.f32 %v1043, 1.0
      %v1100 = vadd.f32 %v1045, 1.0
      %v1101 = vadd.f32 %v1047, 1.0
      %v1102 = vadd.f32 %v1049, 1.0
      %v1103 = vadd.f32 %v1051, 1.0
      %v1104 = vadd.f32 %v1053, 1.0
      %v1105 = vadd.f32 %v1055, 1.0
      %v1106 = vadd.f32 %v1057, 1.0
      %v1107 = vadd.f32 %v1059, 1.0
      %v1108 = vlaneseq
      %v1109 = vshrl.u32 %v1108, 7
      %v1110 = vadd.s32 %v1109, 8
      %v1111 = vadd.s32 %v1109, 16
      %v1112 = vadd.s32 %v1109, 24
      %v1113 = vadd.s32 %v1109, 32
      %v1114 = vadd.s32 %v1109, 40
      %v1115 = vadd.s32 %v1109, 48
      %v1116 = vadd.s32 %v1109, 56
      %v1117 = vadd.s32 %v1109, 64
      %v1118 = vadd.s32 %v1109, 72
      %v1119 = vadd.s32 %v1109, 80
      %v1120 = vadd.s32 %v1109, 88
      %v1121 = vadd.s32 %v1109, 96
      %v1122 = vadd.s32 %v1109, 104
      %v1123 = vadd.s32 %v1109, 112
      %v1124 = vadd.s32 %v1109, 120
      %v1125 = vstv %s379
      %v1126 = vadd.s32 %v1125, %v1109
      %v1127 = vadd.s32 %v1125, %v1110
      %v1128 = vadd.s32 %v1125, %v1111
      %v1129 = vadd.s32 %v1125, %v1112
      %v1130 = vadd.s32 %v1125, %v1113
      %v1131 = vadd.s32 %v1125, %v1114
      %v1132 = vadd.s32 %v1125, %v1115
      %v1133 = vadd.s32 %v1125, %v1116
      %v1134 = vadd.s32 %v1125, %v1117
      %v1135 = vadd.s32 %v1125, %v1118
      %v1136 = vadd.s32 %v1125, %v1119
      %v1137 = vadd.s32 %v1125, %v1120
      %v1138 = vadd.s32 %v1125, %v1121
      %v1139 = vadd.s32 %v1125, %v1122
      %v1140 = vadd.s32 %v1125, %v1123
      %v1141 = vadd.s32 %v1125, %v1124
      %vm1142 = vcmp.gt.f32.partialorder %v933, 0.0
      %vm1143 = vcmp.gt.f32.partialorder %v935, 0.0
      %vm1144 = vcmp.gt.f32.partialorder %v937, 0.0
      %vm1145 = vcmp.gt.f32.partialorder %v939, 0.0
      %vm1146 = vcmp.gt.f32.partialorder %v941, 0.0
      %vm1147 = vcmp.gt.f32.partialorder %v943, 0.0
      %vm1148 = vcmp.gt.f32.partialorder %v945, 0.0
      %vm1149 = vcmp.gt.f32.partialorder %v947, 0.0
      %vm1150 = vcmp.gt.f32.partialorder %v949, 0.0
      %vm1151 = vcmp.gt.f32.partialorder %v951, 0.0
      %vm1152 = vcmp.gt.f32.partialorder %v953, 0.0
      %vm1153 = vcmp.gt.f32.partialorder %v955, 0.0
      %vm1154 = vcmp.gt.f32.partialorder %v957, 0.0
      %vm1155 = vcmp.gt.f32.partialorder %v959, 0.0
      %vm1156 = vcmp.gt.f32.partialorder %v961, 0.0
      %vm1157 = vcmp.gt.f32.partialorder %v963, 0.0
      %vm1158 = vcmp.lt.s32.totalorder %v1126, 8
      %vm1159 = vcmp.lt.s32.totalorder %v1127, 8
      %vm1160 = vcmp.lt.s32.totalorder %v1128, 8
      %vm1161 = vcmp.lt.s32.totalorder %v1129, 8
      %vm1162 = vcmp.lt.s32.totalorder %v1130, 8
      %vm1163 = vcmp.lt.s32.totalorder %v1131, 8
      %vm1164 = vcmp.lt.s32.totalorder %v1132, 8
      %vm1165 = vcmp.lt.s32.totalorder %v1133, 8
      %vm1166 = vcmp.lt.s32.totalorder %v1134, 8
      %vm1167 = vcmp.lt.s32.totalorder %v1135, 8
      %vm1168 = vcmp.lt.s32.totalorder %v1136, 8
      %vm1169 = vcmp.lt.s32.totalorder %v1137, 8
      %vm1170 = vcmp.lt.s32.totalorder %v1138, 8
      %vm1171 = vcmp.lt.s32.totalorder %v1139, 8
      %vm1172 = vcmp.lt.s32.totalorder %v1140, 8
      %vm1173 = vcmp.lt.s32.totalorder %v1141, 8
      %vm1174 = vmand %vm1142, %vm1158
      %vm1175 = vmand %vm1143, %vm1159
      %vm1176 = vmand %vm1144, %vm1160
      %vm1177 = vmand %vm1145, %vm1161
      %vm1178 = vmand %vm1146, %vm1162
      %vm1179 = vmand %vm1147, %vm1163
      %vm1180 = vmand %vm1148, %vm1164
      %vm1181 = vmand %vm1149, %vm1165
      %vm1182 = vmand %vm1150, %vm1166
      %vm1183 = vmand %vm1151, %vm1167
      %vm1184 = vmand %vm1152, %vm1168
      %vm1185 = vmand %vm1153, %vm1169
      %vm1186 = vmand %vm1154, %vm1170
      %vm1187 = vmand %vm1155, %vm1171
      %vm1188 = vmand %vm1156, %vm1172
      %vm1189 = vmand %vm1157, %vm1173
      %v1190 = vlog2.pop %v1092
      %v1191 = vmul.f32 %v1190, 0.6931472
      %v1192 = vlog2.pop %v1093
      %v1193 = vmul.f32 %v1192, 0.6931472
      %v1194 = vlog2.pop %v1094
      %v1195 = vmul.f32 %v1194, 0.6931472
      %v1196 = vlog2.pop %v1095
      %v1197 = vmul.f32 %v1196, 0.6931472
      %v1198 = vlog2.pop %v1096
      %v1199 = vmul.f32 %v1198, 0.6931472
      %v1200 = vlog2.pop %v1097
      %v1201 = vmul.f32 %v1200, 0.6931472
      %v1202 = vlog2.pop %v1098
      %v1203 = vmul.f32 %v1202, 0.6931472
      %v1204 = vlog2.pop %v1099
      %v1205 = vmul.f32 %v1204, 0.6931472
      %v1206 = vlog2.pop %v1100
      %v1207 = vmul.f32 %v1206, 0.6931472
      %v1208 = vlog2.pop %v1101
      %v1209 = vmul.f32 %v1208, 0.6931472
      %v1210 = vlog2.pop %v1102
      %v1211 = vmul.f32 %v1210, 0.6931472
      %v1212 = vlog2.pop %v1103
      %v1213 = vmul.f32 %v1212, 0.6931472
      %v1214 = vlog2.pop %v1104
      %v1215 = vmul.f32 %v1214, 0.6931472
      %v1216 = vlog2.pop %v1105
      %v1217 = vmul.f32 %v1216, 0.6931472
      %v1218 = vlog2.pop %v1106
      %v1219 = vmul.f32 %v1218, 0.6931472
      %v1220 = vlog2.pop %v1107
      %v1221 = vmul.f32 %v1220, 0.6931472
      %v1222 = vlog2.pop %v1076
      %v1223 = vmul.f32 %v1222, 0.6931472
      %v1224 = vlog2.pop %v1077
      %v1225 = vmul.f32 %v1224, 0.6931472
      %v1226 = vlog2.pop %v1078
      %v1227 = vmul.f32 %v1226, 0.6931472
      %v1228 = vlog2.pop %v1079
      %v1229 = vmul.f32 %v1228, 0.6931472
      %v1230 = vlog2.pop %v1080
      %v1231 = vmul.f32 %v1230, 0.6931472
      %v1232 = vlog2.pop %v1081
      %v1233 = vmul.f32 %v1232, 0.6931472
      %v1234 = vlog2.pop %v1082
      %v1235 = vmul.f32 %v1234, 0.6931472
      %v1236 = vlog2.pop %v1083
      %v1237 = vmul.f32 %v1236, 0.6931472
      %v1238 = vlog2.pop %v1084
      %v1239 = vmul.f32 %v1238, 0.6931472
      %v1240 = vlog2.pop %v1085
      %v1241 = vmul.f32 %v1240, 0.6931472
      %v1242 = vlog2.pop %v1086
      %v1243 = vmul.f32 %v1242, 0.6931472
      %v1244 = vlog2.pop %v1087
      %v1245 = vmul.f32 %v1244, 0.6931472
      %v1246 = vlog2.pop %v1088
      %v1247 = vmul.f32 %v1246, 0.6931472
      %v1248 = vlog2.pop %v1089
      %v1249 = vmul.f32 %v1248, 0.6931472
      %v1250 = vlog2.pop %v1090
      %v1251 = vmul.f32 %v1250, 0.6931472
      %v1252 = vlog2.pop %v1091
      %v1253 = vmul.f32 %v1252, 0.6931472
      %v1254 = vsub.f32 %v1191, %v1223
      %v1255 = vsub.f32 %v1193, %v1225
      %v1256 = vsub.f32 %v1195, %v1227
      %v1257 = vsub.f32 %v1197, %v1229
      %v1258 = vsub.f32 %v1199, %v1231
      %v1259 = vsub.f32 %v1201, %v1233
      %v1260 = vsub.f32 %v1203, %v1235
      %v1261 = vsub.f32 %v1205, %v1237
      %v1262 = vsub.f32 %v1207, %v1239
      %v1263 = vsub.f32 %v1209, %v1241
      %v1264 = vsub.f32 %v1211, %v1243
      %v1265 = vsub.f32 %v1213, %v1245
      %v1266 = vsub.f32 %v1215, %v1247
      %v1267 = vsub.f32 %v1217, %v1249
      %v1268 = vsub.f32 %v1219, %v1251
      %v1269 = vsub.f32 %v1221, %v1253
      %v1270 = vmax.f32 %v933, 1.0
      %v1271 = vmax.f32 %v935, 1.0
      %v1272 = vmax.f32 %v937, 1.0
      %v1273 = vmax.f32 %v939, 1.0
      %v1274 = vmax.f32 %v941, 1.0
      %v1275 = vmax.f32 %v943, 1.0
      %v1276 = vmax.f32 %v945, 1.0
      %v1277 = vmax.f32 %v947, 1.0
      %v1278 = vmax.f32 %v949, 1.0
      %v1279 = vmax.f32 %v951, 1.0
      %v1280 = vmax.f32 %v953, 1.0
      %v1281 = vmax.f32 %v955, 1.0
      %v1282 = vmax.f32 %v957, 1.0
      %v1283 = vmax.f32 %v959, 1.0
      %v1284 = vmax.f32 %v961, 1.0
      %v1285 = vmax.f32 %v963, 1.0
      %v1286 = vrcp.pop %v1270
      %v1287 = vmul.f32 %v1254, %v1286
      %v1288 = vrcp.pop %v1271
      %v1289 = vmul.f32 %v1255, %v1288
      %v1290 = vrcp.pop %v1272
      %v1291 = vmul.f32 %v1256, %v1290
      %v1292 = vrcp.pop %v1273
      %v1293 = vmul.f32 %v1257, %v1292
      %v1294 = vrcp.pop %v1274
      %v1295 = vmul.f32 %v1258, %v1294
      %v1296 = vrcp.pop %v1275
      %v1297 = vmul.f32 %v1259, %v1296
      %v1298 = vrcp.pop %v1276
      %v1299 = vmul.f32 %v1260, %v1298
      %v1300 = vrcp.pop %v1277
      %v1301 = vmul.f32 %v1261, %v1300
      %v1302 = vrcp.pop %v1278
      %v1303 = vmul.f32 %v1262, %v1302
      %v1304 = vrcp.pop %v1279
      %v1305 = vmul.f32 %v1263, %v1304
      %v1306 = vrcp.pop %v1280
      %v1307 = vmul.f32 %v1264, %v1306
      %v1308 = vrcp.pop %v1281
      %v1309 = vmul.f32 %v1265, %v1308
      %v1310 = vrcp.pop %v1282
      %v1311 = vmul.f32 %v1266, %v1310
      %v1312 = vrcp.pop %v1283
      %v1313 = vmul.f32 %v1267, %v1312
      %v1314 = vrcp.pop %v1284
      %v1315 = vmul.f32 %v1268, %v1314
      %v1316 = vrcp.pop %v1285
      %v1317 = vmul.f32 %v1269, %v1316
      %v1318 = vsel %vm1174, %v1287, 0.0
      %v1319 = vsel %vm1175, %v1289, 0.0
      %v1320 = vsel %vm1176, %v1291, 0.0
      %v1321 = vsel %vm1177, %v1293, 0.0
      %v1322 = vsel %vm1178, %v1295, 0.0
      %v1323 = vsel %vm1179, %v1297, 0.0
      %v1324 = vsel %vm1180, %v1299, 0.0
      %v1325 = vsel %vm1181, %v1301, 0.0
      %v1326 = vsel %vm1182, %v1303, 0.0
      %v1327 = vsel %vm1183, %v1305, 0.0
      %v1328 = vsel %vm1184, %v1307, 0.0
      %v1329 = vsel %vm1185, %v1309, 0.0
      %v1330 = vsel %vm1186, %v1311, 0.0
      %v1331 = vsel %vm1187, %v1313, 0.0
      %v1332 = vsel %vm1188, %v1315, 0.0
      %v1333 = vsel %vm1189, %v1317, 0.0
      %vm1334 = vcmask 7168
      %1335 = vst.msk [vmem:[%s4] sm:$0xff] %vm1334, %v1318
      %1336 = vst.msk [vmem:[%s4 + $0x8] sm:$0xff] %vm1334, %v1319
      %1337 = vst.msk [vmem:[%s4 + $0x10] sm:$0xff] %vm1334, %v1320
      %1338 = vst.msk [vmem:[%s4 + $0x18] sm:$0xff] %vm1334, %v1321
      %1339 = vst.msk [vmem:[%s4 + $0x20] sm:$0xff] %vm1334, %v1322
      %1340 = vst.msk [vmem:[%s4 + $0x28] sm:$0xff] %vm1334, %v1323
      %1341 = vst.msk [vmem:[%s4 + $0x30] sm:$0xff] %vm1334, %v1324
      %1342 = vst.msk [vmem:[%s4 + $0x38] sm:$0xff] %vm1334, %v1325
      %1343 = vst.msk [vmem:[%s4 + $0x40] sm:$0xff] %vm1334, %v1326
      %1344 = vst.msk [vmem:[%s4 + $0x48] sm:$0xff] %vm1334, %v1327
      %1345 = vst.msk [vmem:[%s4 + $0x50] sm:$0xff] %vm1334, %v1328
      %1346 = vst.msk [vmem:[%s4 + $0x58] sm:$0xff] %vm1334, %v1329
      %1347 = vst.msk [vmem:[%s4 + $0x60] sm:$0xff] %vm1334, %v1330
      %1348 = vst.msk [vmem:[%s4 + $0x68] sm:$0xff] %vm1334, %v1331
      %1349 = vst.msk [vmem:[%s4 + $0x70] sm:$0xff] %vm1334, %v1332
      %1350 = vst.msk [vmem:[%s4 + $0x78] sm:$0xff] %vm1334, %v1333
      %v1351 = vsel %vm1174, 1, 0
      %v1352 = vsel %vm1175, 1, 0
      %v1353 = vsel %vm1176, 1, 0
      %v1354 = vsel %vm1177, 1, 0
      %v1355 = vsel %vm1178, 1, 0
      %v1356 = vsel %vm1179, 1, 0
      %v1357 = vsel %vm1180, 1, 0
      %v1358 = vsel %vm1181, 1, 0
      %v1359 = vsel %vm1182, 1, 0
      %v1360 = vsel %vm1183, 1, 0
      %v1361 = vsel %vm1184, 1, 0
      %v1362 = vsel %vm1185, 1, 0
      %v1363 = vsel %vm1186, 1, 0
      %v1364 = vsel %vm1187, 1, 0
      %v1365 = vsel %vm1188, 1, 0
      %v1366 = vsel %vm1189, 1, 0
      %v1367 = vcvt.s32.f32 %v1351
      %v1368 = vcvt.s32.f32 %v1352
      %v1369 = vcvt.s32.f32 %v1353
      %v1370 = vcvt.s32.f32 %v1354
      %v1371 = vcvt.s32.f32 %v1355
      %v1372 = vcvt.s32.f32 %v1356
      %v1373 = vcvt.s32.f32 %v1357
      %v1374 = vcvt.s32.f32 %v1358
      %v1375 = vcvt.s32.f32 %v1359
      %v1376 = vcvt.s32.f32 %v1360
      %v1377 = vcvt.s32.f32 %v1361
      %v1378 = vcvt.s32.f32 %v1362
      %v1379 = vcvt.s32.f32 %v1363
      %v1380 = vcvt.s32.f32 %v1364
      %v1381 = vcvt.s32.f32 %v1365
      %v1382 = vcvt.s32.f32 %v1366
      %1383 = vst.msk [vmem:[%s5] sm:$0xff] %vm1334, %v1367
      %1384 = vst.msk [vmem:[%s5 + $0x8] sm:$0xff] %vm1334, %v1368
      %1385 = vst.msk [vmem:[%s5 + $0x10] sm:$0xff] %vm1334, %v1369
      %1386 = vst.msk [vmem:[%s5 + $0x18] sm:$0xff] %vm1334, %v1370
      %1387 = vst.msk [vmem:[%s5 + $0x20] sm:$0xff] %vm1334, %v1371
      %1388 = vst.msk [vmem:[%s5 + $0x28] sm:$0xff] %vm1334, %v1372
      %1389 = vst.msk [vmem:[%s5 + $0x30] sm:$0xff] %vm1334, %v1373
      %1390 = vst.msk [vmem:[%s5 + $0x38] sm:$0xff] %vm1334, %v1374
      %1391 = vst.msk [vmem:[%s5 + $0x40] sm:$0xff] %vm1334, %v1375
      %1392 = vst.msk [vmem:[%s5 + $0x48] sm:$0xff] %vm1334, %v1376
      %1393 = vst.msk [vmem:[%s5 + $0x50] sm:$0xff] %vm1334, %v1377
      %1394 = vst.msk [vmem:[%s5 + $0x58] sm:$0xff] %vm1334, %v1378
      %1395 = vst.msk [vmem:[%s5 + $0x60] sm:$0xff] %vm1334, %v1379
      %1396 = vst.msk [vmem:[%s5 + $0x68] sm:$0xff] %vm1334, %v1380
      %1397 = vst.msk [vmem:[%s5 + $0x70] sm:$0xff] %vm1334, %v1381
      %1398 = vst.msk [vmem:[%s5 + $0x78] sm:$0xff] %vm1334, %v1382
    $region37: #{tpu_custom_call.1} parent=1 // pred_fallthru
      _
    // Predicated region
    $region38: #{tpu_custom_call.1} parent=1 // pred_check
      _
    $region39: #{tpu_custom_call.1} parent=1 // pred_check_branch
      %1400 = sbr.rel (0) target = $region41
    $region40: #{tpu_custom_call.1} parent=1 // pred_region
      _
    $region41: #{tpu_custom_call.1} parent=1 // pred_fallthru
      _
    // Predicated region
    $region42: #{tpu_custom_call.1} parent=1 // pred_check
      _
    $region43: #{tpu_custom_call.1} parent=1 // pred_check_branch
      %1402 = sbr.rel (0) target = $region45
    $region44: #{tpu_custom_call.1} parent=1 // pred_region
      _
    $region45: #{tpu_custom_call.1} parent=1 // pred_fallthru
      _
    // Predicated region
    $region46: #{tpu_custom_call.1} parent=1 // pred_check
      _
    $region47: #{tpu_custom_call.1} parent=1 // pred_check_branch
      %1404 = sbr.rel (0) target = $region49
    $region48: #{tpu_custom_call.1} parent=1 // pred_region
      _
    $region49: #{tpu_custom_call.1} parent=1 // pred_fallthru
      _
    // Predicated region
    $region50: #{tpu_custom_call.1} parent=1 // pred_check
      _
    $region51: #{tpu_custom_call.1} parent=1 // pred_check_branch
      %1406 = sbr.rel (0) target = $region53
    $region52: #{tpu_custom_call.1} parent=1 // pred_region
      _
    $region53: #{tpu_custom_call.1} parent=1 // pred_fallthru
      _
    %1407 = vsyncpa [#allocation6], 1

</llo_original>
